<compile_context>
chip_gen: v5e
topology: v5e:2x2
jax: 0.10.0
libtpu: 0.0.40
codegen_flags: <defaults>
</compile_context>

<pallas_src>
import math

import jax
import jax.numpy as jnp
import numpy as np
from jax.experimental import pallas as pl
from jax.experimental.pallas import tpu as pltpu


def _round_up(x, m):
    return ((x + m - 1) // m) * m


def _pad2d(x, rows, cols, dtype=jnp.float32):
    r, c = x.shape
    return jnp.pad(x.astype(dtype), ((0, rows - r), (0, cols - c)))


def _vmem_capacity_bytes():
    try:
        return int(pltpu.get_tpu_info().vmem_capacity_bytes)
    except Exception:
        return 64 * 1024 * 1024      # conservative (v7x per-TensorCore VMEM)


# ----------------------------------------------------------------------------
# Fused kernel: feedback-propagation chain + per-layer weight alignments.
# ----------------------------------------------------------------------------
def update_direct_propagated_feedback_weights_and_alignments(
        ordered_weights,
        *,
        weight_dtype=jnp.float32,            # bf16 halves W DMA bytes if desired
        precision=jax.lax.Precision.HIGHEST  # match torch float32 matmul numerics
):
    """Mirror of Module.update_direct_propagated_feedback_weight followed by
    Module.get_dir_weight_alignments (direct-feedback-propagation mode).

    ordered_weights: [W_1, ..., W_L], W_l shape (out_l, in_l).
    Returns (feedbacks, angles_deg):
      feedbacks[l] = W_l^T @ ... @ W_L^T   shape (in_l, out_L)
      angles_deg   = (L,) array, angle between flat(W_l) and
                     flat(fb_{l+1} @ fb_l^T)  (last layer: flat(fb_L^T)).
    """
    L = len(ordered_weights)
    out_dims = [int(w.shape[0]) for w in ordered_weights]
    in_dims = [int(w.shape[1]) for w in ordered_weights]
    out_last = out_dims[-1]

    # Per-dimension padding (not a single global square pad).
    P_out = _round_up(max(out_dims), 128)
    P_in = _round_up(max(in_dims), 128)
    PK = max(P_out, P_in)                 # carry width
    Q = _round_up(out_last, 128)          # fb column count (out_L), padded

    w_stack = jnp.stack(
        [_pad2d(w, P_out, P_in, weight_dtype) for w in ordered_weights])

    def kernel(w_ref, fbT_ref, cos_ref, prod_ref, gram_ref):
        k = pl.program_id(0)
        layer = (L - 1) - k                      # forward-order layer index
        w = w_ref[0].astype(jnp.float32)         # (P_out, P_in), zero padded

        @pl.when(k == 0)
        def _seed():
            # fb_L = W_L^T  =>  fb_L^T = W_L : seed the transposed carry
            # directly from the weight block (skips the identity matmul).
            prod_ref[:, :P_in] = w[:Q, :]
            if PK > P_in:
                prod_ref[:, P_in:] = jnp.zeros((Q, PK - P_in), jnp.float32)
            # Gram of the "virtual" fb_{L+1} = I_{out_last}  (so the last
            # layer's alignment reduces to W_L vs fb_L^T, as in the module).
            row = jax.lax.broadcasted_iota(jnp.int32, (Q, Q), 0)
            col = jax.lax.broadcasted_iota(jnp.int32, (Q, Q), 1)
            gram_ref[...] = jnp.where(
                (row == col) & (col < out_last), 1.0, 0.0).astype(jnp.float32)

        @pl.when(k > 0)
        def _chain_step():
            # fb_l^T = fb_{l+1}^T @ W_l  : canonical (M,K)x(K,N) MXU matmul,
            # no transposed-LHS feed.
            new_T = jax.lax.dot_general(
                prod_ref[:, :P_out], w,
                dimension_numbers=(((1,), (0,)), ((), ())),
                preferred_element_type=jnp.float32,
                precision=precision)
            prod_ref[:, :P_in] = new_T
            if PK > P_in:
                prod_ref[:, P_in:] = jnp.zeros((Q, PK - P_in), jnp.float32)

        fb_T = prod_ref[:, :P_in]                # (Q, P_in) == fb_l^T (padded)
        fbT_ref[0] = fb_T

        # Fused alignment: cos angle between W_l and x2 = fb_{l+1} @ fb_l^T,
        # without materializing x2 (P x P):
        #   <W_l, x2> = |fb_l|^2,   |x2|^2 = <G_{l+1}, G_l>,  G = fb^T fb.
        gram_new = jax.lax.dot_general(
            fb_T, fb_T,
            dimension_numbers=(((1,), (1,)), ((), ())),
            preferred_element_type=jnp.float32,
            precision=precision)                 # G_l, (Q, Q)
        dot = jnp.sum(fb_T * fb_T)               # <W_l, x2>
        n1 = jnp.sum(w * w)                      # |W_l|^2
        n2 = jnp.sum(gram_ref[...] * gram_new)   # |x2|^2
        cos = dot * jax.lax.rsqrt(n1 * n2)       # rsqrt -> EUP slot
        cos_ref[layer] = jnp.clip(cos, -1.0, 1.0)
        gram_ref[...] = gram_new                 # becomes G_{l+1} next step

    # Explicit VMEM budget (double-buffered W + fb blocks + scratch), with
    # headroom for in-kernel temporaries; capped by device VMEM (v7x: 64 MiB).
    itemsize = jnp.dtype(weight_dtype).itemsize
    resident = (2 * P_out * P_in * itemsize      # double-buffered W block
                + 2 * Q * P_in * 4               # double-buffered fb^T block
                + Q * PK * 4 + Q * Q * 4)        # carry + Gram scratch
    vmem_limit = int(min(max(4 * resident, 32 * 1024 * 1024),
                         int(0.9 * _vmem_capacity_bytes())))

    fbT_pad, cosines = pl.pallas_call(
        kernel,
        out_shape=(jax.ShapeDtypeStruct((L, Q, P_in), jnp.float32),
                   jax.ShapeDtypeStruct((L,), jnp.float32)),
        grid=(L,),
        in_specs=[pl.BlockSpec((1, P_out, P_in), lambda k: (L - 1 - k, 0, 0))],
        out_specs=(pl.BlockSpec((1, Q, P_in), lambda k: (L - 1 - k, 0, 0)),
                   pl.BlockSpec(memory_space=pltpu.MemorySpace.SMEM)),
        scratch_shapes=[pltpu.VMEM((Q, PK), jnp.float32),
                        pltpu.VMEM((Q, Q), jnp.float32)],
        compiler_params=pltpu.CompilerParams(
            dimension_semantics=("arbitrary",),   # chain dependency -> serial
            vmem_limit_bytes=vmem_limit),
    )(w_stack)

    # Single tiny glue op on the stacked cosines (no per-layer host syncs).
    angles = (180.0 / math.pi) * jnp.arccos(cosines)
    feedbacks = [jnp.transpose(fbT_pad[i, :out_last, :in_dims[i]])
                 for i in range(L)]
    return feedbacks, angles


def update_direct_propagated_feedback_weights(ordered_weights, **kwargs):
    """Mirror of Module.update_direct_propagated_feedback_weight only."""
    feedbacks, _ = update_direct_propagated_feedback_weights_and_alignments(
        ordered_weights, **kwargs)
    return feedbacks


# ----------------------------------------------------------------------------
# SequentialFeedbackModule.get_weight_alignment (single layer, arbitrary fb).
# ----------------------------------------------------------------------------
def _single_alignment_kernel(w_ref, fbt_ref, cos_ref):
    w = w_ref[...]
    f = fbt_ref[...]
    dot = jnp.sum(w * f)
    n1 = jnp.sum(w * w)
    n2 = jnp.sum(f * f)
    cos_ref[0] = jnp.clip(dot * jax.lax.rsqrt(n1 * n2), -1.0, 1.0)


def get_weight_alignment(weight, feedback_weight):
    """Angle (deg) between flat(W) (out,in) and flat(fb^T) (fb is (in,out))."""
    out_d, in_d = weight.shape
    R = _round_up(out_d, 8)
    C = _round_up(in_d, 128)
    w_p = _pad2d(weight, R, C)
    fbt_p = _pad2d(jnp.transpose(feedback_weight), R, C)
    cos = pl.pallas_call(
        _single_alignment_kernel,
        out_shape=jax.ShapeDtypeStruct((1,), jnp.float32),
        in_specs=[pl.BlockSpec(memory_space=pltpu.MemorySpace.VMEM),
                  pl.BlockSpec(memory_space=pltpu.MemorySpace.VMEM)],
        out_specs=pl.BlockSpec(memory_space=pltpu.MemorySpace.SMEM),
    )(w_p, fbt_p)
    return (180.0 / math.pi) * jnp.arccos(cos[0])


# ----------------------------------------------------------------------------
# Self-test against plain-JAX / numpy references.
# ----------------------------------------------------------------------------
def _ref_alignment_deg(w, x2):
    a = np.asarray(w, np.float64).reshape(-1)
    b = np.asarray(x2, np.float64).reshape(-1)
    c = float(np.dot(a, b) / (np.linalg.norm(a) * np.linalg.norm(b)))
    return 180.0 / math.pi * math.acos(min(1.0, max(-1.0, c)))


if __name__ == "__main__":
    key = jax.random.PRNGKey(0)
    # Small MLP-like stack of linear weights: 32 -> 64 -> 48 -> 16
    dims = [32, 64, 48, 16]
    weights = []
    for i in range(len(dims) - 1):
        key, sub = jax.random.split(key)
        fan_in = dims[i]
        w = jax.random.uniform(
            sub, (dims[i + 1], dims[i]), jnp.float32,
            minval=-1.0 / math.sqrt(fan_in), maxval=1.0 / math.sqrt(fan_in))
        weights.append(w)

    # --- fused feedback chain + alignments (single pallas_call) ---
    feedbacks, angles = update_direct_propagated_feedback_weights_and_alignments(
        weights)
    feedbacks = [jax.block_until_ready(fb) for fb in feedbacks]
    angles = np.asarray(jax.block_until_ready(angles))

    # Reference chain in plain JAX (full f32 precision).
    ref_prod = jnp.transpose(weights[-1])
    ref_rev = [ref_prod]
    for w in list(reversed(weights))[1:]:
        ref_prod = jnp.matmul(jnp.transpose(w), ref_prod, precision="highest")
        ref_rev.append(ref_prod)
    ref_feedbacks = list(reversed(ref_rev))

    # Tolerances leave room for the MXU's f32-emulation passes (the kernel
    # requests Precision.HIGHEST, but any multi-pass bf16 path stays well
    # inside these bounds, while an indexing/transpose bug would not).
    for fb, ref_fb in zip(feedbacks, ref_feedbacks):
        np.testing.assert_allclose(np.asarray(fb), np.asarray(ref_fb),
                                   rtol=5e-3, atol=5e-4)

    ref_angles = []
    for i in range(len(weights) - 1):
        x2 = np.asarray(ref_feedbacks[i + 1]) @ np.asarray(ref_feedbacks[i]).T
        ref_angles.append(_ref_alignment_deg(weights[i], x2))
    ref_angles.append(_ref_alignment_deg(weights[-1],
                                         np.asarray(ref_feedbacks[-1]).T))

    # Non-degenerate layers: compare directly (degrees).
    np.testing.assert_allclose(angles[:-1], np.asarray(ref_angles[:-1]),
                               rtol=0.0, atol=1.5)
    # Last layer: fb_L = W_L^T exactly, so the true angle is 0 and arccos is
    # ill-conditioned there; both kernel and reference produce only rounding
    # noise — assert both are small rather than equal.
    assert angles[-1] < 5.0 and ref_angles[-1] < 5.0, (angles[-1], ref_angles[-1])

    # --- SequentialFeedbackModule.get_weight_alignment for a single layer ---
    key, sub = jax.random.split(key)
    fb_single = jax.random.normal(sub, (dims[0], dims[1]), jnp.float32)  # (in,out)
    angle1 = float(jax.block_until_ready(get_weight_alignment(weights[0],
                                                              fb_single)))
    ref_angle1 = _ref_alignment_deg(weights[0], np.asarray(fb_single).T)
    np.testing.assert_allclose(angle1, ref_angle1, rtol=1e-3, atol=0.05)

    print("KERNEL_OK")
</pallas_src>

<mosaic_0001>
module attributes {stable_mosaic.version = 11 : i64} {
  func.func @kernel(%arg0: i32, %arg1: memref<1x128x128xf32, #tpu.memory_space<vmem>>, %arg2: memref<1x128x128xf32, #tpu.memory_space<vmem>>, %arg3: memref<3xf32, #tpu.memory_space<smem>>, %arg4: memref<128x128xf32, #tpu.memory_space<vmem>>, %arg5: memref<128x128xf32, #tpu.memory_space<vmem>>) attributes {dimension_semantics = [#tpu.dimension_semantics<arbitrary>], iteration_bounds = array<i64: 3>, scalar_prefetch = 0 : i64, scratch_operands = 2 : i64, tpu.core_type = #tpu.core_type<tc>, window_params = [{transform_indices = @transform_0, window_bounds = array<i64: 1, 128, 128>}, {transform_indices = @transform_1, window_bounds = array<i64: 1, 128, 128>}, {transform_indices = @transform_2, window_bounds = array<i64: 3>}]} {
    %c2_i32 = arith.constant 2 : i32
    %0 = arith.subi %c2_i32, %arg0 : i32
    %c0 = arith.constant 0 : index
    %c0_0 = arith.constant 0 : index
    %c0_1 = arith.constant 0 : index
    %1 = vector.load %arg1[%c0, %c0_0, %c0_1] : memref<1x128x128xf32, #tpu.memory_space<vmem>>, vector<1x128x128xf32>
    %2 = vector.shape_cast %1 : vector<1x128x128xf32> to vector<128x128xf32>
    %c0_i32 = arith.constant 0 : i32
    %3 = arith.cmpi eq, %arg0, %c0_i32 : i32
    %4 = arith.extui %3 : i1 to i32
    %c0_i32_2 = arith.constant 0 : i32
    %5 = arith.cmpi ne, %4, %c0_i32_2 : i32
    scf.if %5 {
      %c0_19 = arith.constant 0 : index
      %c0_20 = arith.constant 0 : index
      %38 = vector.load %arg4[%c0_19, %c0_20] : memref<128x128xf32, #tpu.memory_space<vmem>>, vector<128x128xf32>
      tpu.vector_store %arg4[%c0_19, %c0_20], %2 {strides = array<i32>} : memref<128x128xf32, #tpu.memory_space<vmem>>, vector<128x128xf32>,
      %39 = tpu.iota {dimensions = array<i32: 0>} : vector<128x128xi32>
      %40 = tpu.iota {dimensions = array<i32: 1>} : vector<128x128xi32>
      %41 = arith.cmpi eq, %39, %40 : vector<128x128xi32>
      %c16_i32 = arith.constant 16 : i32
      %42 = vector.broadcast %c16_i32 : i32 to vector<128x128xi32>
      %43 = arith.cmpi slt, %40, %42 : vector<128x128xi32>
      %44 = arith.andi %41, %43 : vector<128x128xi1>
      %cst_21 = arith.constant 1.000000e+00 : f32
      %cst_22 = arith.constant 0.000000e+00 : f32
      %45 = vector.broadcast %cst_21 : f32 to vector<128x128xf32>
      %46 = vector.broadcast %cst_22 : f32 to vector<128x128xf32>
      %47 = arith.select %44, %45, %46 : vector<128x128xi1>, vector<128x128xf32>
      %c0_23 = arith.constant 0 : index
      %c0_24 = arith.constant 0 : index
      %48 = vector.load %arg5[%c0_23, %c0_24] : memref<128x128xf32, #tpu.memory_space<vmem>>, vector<128x128xf32>
      tpu.vector_store %arg5[%c0_23, %c0_24], %47 {strides = array<i32>} : memref<128x128xf32, #tpu.memory_space<vmem>>, vector<128x128xf32>,
    } else {
    }
    %c0_i32_3 = arith.constant 0 : i32
    %6 = arith.cmpi sgt, %arg0, %c0_i32_3 : i32
    %7 = arith.extui %6 : i1 to i32
    %c0_i32_4 = arith.constant 0 : i32
    %8 = arith.cmpi ne, %7, %c0_i32_4 : i32
    scf.if %8 {
      %c0_19 = arith.constant 0 : index
      %c0_20 = arith.constant 0 : index
      %38 = vector.load %arg4[%c0_19, %c0_20] : memref<128x128xf32, #tpu.memory_space<vmem>>, vector<128x128xf32>
      %cst_21 = arith.constant dense<0.000000e+00> : vector<128x128xf32>
      %39 = tpu.matmul %38, %2, %cst_21 {dimension_numbers = #tpu.dot_dimension_numbers<[1], [0], [0], [1], [0, 0, 1, 1], [], []>, precision = #tpu.contract_precision<fp32>} : vector<128x128xf32>, vector<128x128xf32>, vector<128x128xf32> -> vector<128x128xf32>
      %c0_22 = arith.constant 0 : index
      %c0_23 = arith.constant 0 : index
      %40 = vector.load %arg4[%c0_22, %c0_23] : memref<128x128xf32, #tpu.memory_space<vmem>>, vector<128x128xf32>
      tpu.vector_store %arg4[%c0_22, %c0_23], %39 {strides = array<i32>} : memref<128x128xf32, #tpu.memory_space<vmem>>, vector<128x128xf32>,
    } else {
    }
    %c0_5 = arith.constant 0 : index
    %c0_6 = arith.constant 0 : index
    %9 = vector.load %arg4[%c0_5, %c0_6] : memref<128x128xf32, #tpu.memory_space<vmem>>, vector<128x128xf32>
    %c0_7 = arith.constant 0 : index
    %c0_8 = arith.constant 0 : index
    %c0_9 = arith.constant 0 : index
    %10 = vector.load %arg2[%c0_7, %c0_8, %c0_9] : memref<1x128x128xf32, #tpu.memory_space<vmem>>, vector<1x128x128xf32>
    %11 = vector.shape_cast %10 : vector<1x128x128xf32> to vector<128x128xf32>
    %12 = vector.shape_cast %9 : vector<128x128xf32> to vector<1x128x128xf32>
    tpu.vector_store %arg2[%c0_7, %c0_8, %c0_9], %12 {strides = array<i32>} : memref<1x128x128xf32, #tpu.memory_space<vmem>>, vector<1x128x128xf32>,
    %cst = arith.constant dense<0.000000e+00> : vector<128x128xf32>
    %13 = tpu.matmul %9, %9, %cst {dimension_numbers = #tpu.dot_dimension_numbers<[1], [1], [0], [0], [0, 0, 1, 0], [], []>, precision = #tpu.contract_precision<fp32>} : vector<128x128xf32>, vector<128x128xf32>, vector<128x128xf32> -> vector<128x128xf32>
    %14 = arith.mulf %9, %9 : vector<128x128xf32>
    %15 = vector.shape_cast %14 : vector<128x128xf32> to vector<1x128x128xf32>
    %cst_10 = arith.constant dense<0.000000e+00> : vector<1xf32>
    %16 = vector.multi_reduction <add>, %15, %cst_10 [1, 2] : vector<1x128x128xf32> to vector<1xf32>
    %17 = vector.shape_cast %16 : vector<1xf32> to vector<1x1x1xf32>
    %18 = vector.extract %17[0, 0, 0] : f32 from vector<1x1x1xf32>
    %19 = arith.mulf %2, %2 : vector<128x128xf32>
    %20 = vector.shape_cast %19 : vector<128x128xf32> to vector<1x128x128xf32>
    %cst_11 = arith.constant dense<0.000000e+00> : vector<1xf32>
    %21 = vector.multi_reduction <add>, %20, %cst_11 [1, 2] : vector<1x128x128xf32> to vector<1xf32>
    %22 = vector.shape_cast %21 : vector<1xf32> to vector<1x1x1xf32>
    %23 = vector.extract %22[0, 0, 0] : f32 from vector<1x1x1xf32>
    %c0_12 = arith.constant 0 : index
    %c0_13 = arith.constant 0 : index
    %24 = vector.load %arg5[%c0_12, %c0_13] : memref<128x128xf32, #tpu.memory_space<vmem>>, vector<128x128xf32>
    %25 = arith.mulf %24, %13 : vector<128x128xf32>
    %26 = vector.shape_cast %25 : vector<128x128xf32> to vector<1x128x128xf32>
    %cst_14 = arith.constant dense<0.000000e+00> : vector<1xf32>
    %27 = vector.multi_reduction <add>, %26, %cst_14 [1, 2] : vector<1x128x128xf32> to vector<1xf32>
    %28 = vector.shape_cast %27 : vector<1xf32> to vector<1x1x1xf32>
    %29 = vector.extract %28[0, 0, 0] : f32 from vector<1x1x1xf32>
    %30 = arith.mulf %23, %29 : f32
    %31 = math.rsqrt %30 : f32
    %32 = arith.mulf %18, %31 : f32
    %cst_15 = arith.constant -1.000000e+00 : f32
    %cst_16 = arith.constant 1.000000e+00 : f32
    %33 = arith.maximumf %cst_15, %32 : f32
    %34 = arith.minimumf %cst_16, %33 : f32
    %35 = arith.index_cast %0 : i32 to index
    %36 = memref.load %arg3[%35] : memref<3xf32, #tpu.memory_space<smem>>
    memref.store %34, %arg3[%35] : memref<3xf32, #tpu.memory_space<smem>>
    %c0_17 = arith.constant 0 : index
    %c0_18 = arith.constant 0 : index
    %37 = vector.load %arg5[%c0_17, %c0_18] : memref<128x128xf32, #tpu.memory_space<vmem>>, vector<128x128xf32>
    tpu.vector_store %arg5[%c0_17, %c0_18], %13 {strides = array<i32>} : memref<128x128xf32, #tpu.memory_space<vmem>>, vector<128x128xf32>,
    return
  }
  func.func @transform_0(%arg0: i32) -> (i32, i32, i32) {
    %c2_i32 = arith.constant 2 : i32
    %0 = arith.subi %c2_i32, %arg0 : i32
    %c0_i32 = arith.constant 0 : i32
    %c0_i32_0 = arith.constant 0 : i32
    %c0_i32_1 = arith.constant 0 : i32
    return %0, %c0_i32, %c0_i32_0 : i32, i32, i32
  }
  func.func @transform_1(%arg0: i32) -> (i32, i32, i32) {
    %c2_i32 = arith.constant 2 : i32
    %0 = arith.subi %c2_i32, %arg0 : i32
    %c0_i32 = arith.constant 0 : i32
    %c0_i32_0 = arith.constant 0 : i32
    %c0_i32_1 = arith.constant 0 : i32
    return %0, %c0_i32, %c0_i32_0 : i32, i32, i32
  }
  func.func @transform_2(%arg0: i32) -> i32 {
    %c0_i32 = arith.constant 0 : i32
    %c0_i32_0 = arith.constant 0 : i32
    return %c0_i32 : i32
  }
}

</mosaic_0001>

<llo_original>
// kernel: tpu_custom_call.1
$region0: #{tpu_custom_call.1}
  #allocation0 [shape = 'u32[]', space=smem, size = 0x4, offset = 0x4, fixed_abs, tag = 'smem constant byte address 0x4 - core index']
  #allocation1 [shape = 'u32[72,128]{1,0:T(1,128)}', space=vmem, size = 0x9000, scoped, tag = 'internal scratch']
  #allocation2 [shape = 'f32[128,128]{1,0:T(8,128)}', space=vmem, size = 0x10000, scoped, tag = 'scratch operand']
  #allocation3 [shape = 'f32[128,128]{1,0:T(8,128)}', space=vmem, size = 0x10000, scoped, tag = 'scratch operand']
  %s0 = inlined_call_operand.hbm [shape: f32[3,128,128], index: 0, kind: input, shape index: {}]
  %s1 = inlined_call_operand.hbm [shape: f32[3,128,128], index: 1, kind: output, shape index: {0}]
  %s2 = inlined_call_operand.hbm [shape: f32[3], index: 2, kind: output, shape index: {1}]
  %3 = xla_tuple %s1, %s2
  %s4 = sld [smem:[#allocation0]]
  $region57: #{tpu_custom_call.1} parent=0
    _
  %s6 = ssub.s32 1, %s4
  %s7 = scalar_select 0, %s6, %s4
  $region1: #{tpu_custom_call.1} parent=0
    #allocation4 [shape = 'u8[131072]{0}', space=vmem, size = 0x20000, scoped, tag = 'input window, operand 0']
    #allocation5 [shape = 's32[2]{0}', space=sflag, size = 0x8, scoped, tag = 'scoped memory for tpu_custom_call.1']
    #allocation6 [shape = 's32[2]{0}', space=sflag, size = 0x8, scoped, tag = 'scoped memory for tpu_custom_call.1']
    #allocation7 [shape = 's32[2]{0}', space=sflag, size = 0x8, scoped, tag = 'scoped memory for tpu_custom_call.1']
    #allocation8 [shape = 'u8[131072]{0}', space=vmem, size = 0x20000, scoped, tag = 'output window, operand 0']
    #allocation9 [shape = 'u8[512]{0}', space=smem, size = 0x200, scoped, tag = 'output window, operand 1, single buffered']
    %8 = vsyncpa [#allocation5], 0
    %s9 = scalar_lea.sflag [#allocation5], 1
    %10 = vsyncpa %s9, 0
    %11 = vsyncpa [#allocation6], 0
    %s12 = scalar_lea.sflag [#allocation6], 1
    %13 = vsyncpa %s12, 0
    %14 = vsyncpa [#allocation7], 0
    loop: start=0, step=1, limit=5
    $region2: #{tpu_custom_call.1} parent=1 // loop_pre_header
      _
    $region3: #{tpu_custom_call.1} parent=1 // loop_header
      %s16 = sphi 0, %s20
      %p17 = scmp.ge.s32.totalorder %s16, 5
      %s28 = sphi 0, %s30
      %s31 = sphi 0, %s28
      %s32 = sphi 0, %s31
      %s48 = sphi 0, %s32
      %s56 = sphi 0, %s58
      %s59 = sphi 0, %s56
      %s60 = sphi 0, %s59
      %s76 = sphi 0, %s60
      %s80 = sphi 0, %s80
      %s82 = sphi 0, %s80
      %s83 = sphi 0, %s82
      %s97 = sphi 0, %s83
    $region4: #{tpu_custom_call.1} parent=1 // loop_header_branch
      %19 = sbr.rel (%p17) target = $region8
    $region5: #{tpu_custom_call.1} parent=1 // loop_body
      %s21 = ssub.s32 %s16, 1
      %s22 = ssub.s32 %s16, 2
      %s23 = sadd.s32 %s16, 1
      %s24 = ssub.s32 2, %s16
      %s25 = ssub.s32 2, %s23
      %s26 = ssub.s32 %s24, %s25
      %p27 = scmp.eq.s32.totalorder %s26, 0
      %s29 = sadd.s32 %s28, 1
      %s30 = scalar_select %p27, %s28, %s29
      %p33 = pneg %p27
      %p34 = scmp.eq.s32.totalorder %s16, 2
      %p35 = por %p33, %p34
      %p36 = scmp.ne.s32.totalorder %s28, %s31
      %p37 = scmp.eq.s32.totalorder %s16, 0
      %p38 = por %p36, %p37
      %p39 = scmp.ne.s32.totalorder %s28, %s31
      %p40 = scmp.eq.s32.totalorder %s21, 2
      %p41 = por %p39, %p40
      %p42 = scmp.ne.s32.totalorder %s31, %s32
      %p43 = scmp.eq.s32.totalorder %s21, 0
      %p44 = por %p42, %p43
      %p45 = scmp.ne.s32.totalorder %s31, %s32
      %p46 = scmp.eq.s32.totalorder %s22, 2
      %p47 = por %p45, %p46
      %p49 = scmp.ne.s32.totalorder %s32, %s48
      %p50 = scmp.eq.s32.totalorder %s22, 0
      %p51 = por %p49, %p50
      %s52 = ssub.s32 2, %s16
      %s53 = ssub.s32 2, %s23
      %s54 = ssub.s32 %s52, %s53
      %p55 = scmp.eq.s32.totalorder %s54, 0
      %s57 = sadd.s32 %s56, 1
      %s58 = scalar_select %p55, %s56, %s57
      %p61 = pneg %p55
      %p62 = scmp.eq.s32.totalorder %s16, 2
      %p63 = por %p61, %p62
      %p64 = scmp.ne.s32.totalorder %s56, %s59
      %p65 = scmp.eq.s32.totalorder %s16, 0
      %p66 = por %p64, %p65
      %p67 = scmp.ne.s32.totalorder %s56, %s59
      %p68 = scmp.eq.s32.totalorder %s21, 2
      %p69 = por %p67, %p68
      %p70 = scmp.ne.s32.totalorder %s59, %s60
      %p71 = scmp.eq.s32.totalorder %s21, 0
      %p72 = por %p70, %p71
      %p73 = scmp.ne.s32.totalorder %s59, %s60
      %p74 = scmp.eq.s32.totalorder %s22, 2
      %p75 = por %p73, %p74
      %p77 = scmp.ne.s32.totalorder %s60, %s76
      %p78 = scmp.eq.s32.totalorder %s22, 0
      %p79 = por %p77, %p78
      %s81 = sadd.s32 %s80, 1
      %p84 = scmp.eq.s32.totalorder %s16, 2
      %p85 = scmp.ne.s32.totalorder %s80, %s82
      %p86 = scmp.eq.s32.totalorder %s16, 0
      %p87 = por %p85, %p86
      %p88 = scmp.ne.s32.totalorder %s80, %s82
      %p89 = scmp.eq.s32.totalorder %s21, 2
      %p90 = por %p88, %p89
      %p91 = scmp.ne.s32.totalorder %s82, %s83
      %p92 = scmp.eq.s32.totalorder %s21, 0
      %p93 = por %p91, %p92
      %p94 = scmp.ne.s32.totalorder %s82, %s83
      %p95 = scmp.eq.s32.totalorder %s22, 2
      %p96 = por %p94, %p95
      %p98 = scmp.ne.s32.totalorder %s83, %s97
      %p99 = scmp.eq.s32.totalorder %s22, 0
      %p100 = por %p98, %p99
      %p101 = scmp.le.s32.totalorder 1, %s16
      %p102 = scmp.lt.s32.totalorder %s16, 4
      %p103 = pnand %p101, %p102
      %p104 = pneg %p103
      // Predicated region
      $region9: #{tpu_custom_call.1} parent=5 // pred_check
        _
      $region10: #{tpu_custom_call.1} parent=5 // pred_check_branch
        %106 = sbr.rel (%p103) target = $region12
      $region11: #{tpu_custom_call.1} parent=5 // pred_region
        %s107 = ssub.s32 %s16, 1
      $region12: #{tpu_custom_call.1} parent=5 // pred_fallthru
        _
      %p108 = scmp.lt.s32.totalorder %s16, 3
      // Predicated region
      $region13: #{tpu_custom_call.1} parent=5 // pred_check
        %p109 = pneg %p108
      $region14: #{tpu_custom_call.1} parent=5 // pred_check_branch
        %111 = sbr.rel (%p109) target = $region16
      $region15: #{tpu_custom_call.1} parent=5 // pred_region
        // Predicated region
        $region17: #{tpu_custom_call.1} parent=15 // pred_check
          %p112 = pneg %p38
        $region18: #{tpu_custom_call.1} parent=15 // pred_check_branch
          %114 = sbr.rel (%p112) target = $region20
        $region19: #{tpu_custom_call.1} parent=15 // pred_region
          %s115 = sand.u32 %s28, 1
          %s116 = scalar_lea.sflag [#allocation5], %s115
          %s117 = sand.u32 %s28, 1
          %s118 = smul.addr %s117, 128
          %s119 = scalar_lea.vmem [#allocation4], %s118
          %s120 = ssub.s32 2, %s16
          %122 = vsyncadd %s116, 0
          %s123 = smul.addr %s120, 16
          %s124 = smul.addr %s123, 8
          %s125 = scalar_lea.hbm %s0, %s124
          %s126 = sshll.u32 %s125, 4
          %s127 = int_to_ptr.hbm [resolvable:$true] %s126
          %s128 = sshll.u32 %s119, 4
          %s129 = int_to_ptr.vmem [resolvable:$true] %s128
          %134 = dma.hbm_to_vmem [thread:$0]  %s127, 2048, %s129, %s116, 128, 128, 8
        $region20: #{tpu_custom_call.1} parent=15 // pred_fallthru
          _
      $region16: #{tpu_custom_call.1} parent=5 // pred_fallthru
        _
      %p135 = scmp.le.s32.totalorder 1, %s16
      %p136 = scmp.lt.s32.totalorder %s16, 4
      %p137 = pnand %p135, %p136
      %p138 = pneg %p137
      // Predicated region
      $region21: #{tpu_custom_call.1} parent=5 // pred_check
        _
      $region22: #{tpu_custom_call.1} parent=5 // pred_check_branch
        %140 = sbr.rel (%p137) target = $region24
      $region23: #{tpu_custom_call.1} parent=5 // pred_region
        %s141 = ssub.s32 %s16, 1
        %s142 = sand.u32 %s31, 1
        %s143 = scalar_lea.sflag [#allocation5], %s142
        %s144 = sand.u32 %s31, 1
        %s145 = smul.addr %s144, 128
        %s146 = scalar_lea.vmem [#allocation4], %s145
        // Predicated region
        $region25: #{tpu_custom_call.1} parent=23 // pred_check
          %p147 = pneg %p44
        $region26: #{tpu_custom_call.1} parent=23 // pred_check_branch
          %149 = sbr.rel (%p147) target = $region28
        $region27: #{tpu_custom_call.1} parent=23 // pred_region
          %151 = dma.done %s143, 2048
        $region28: #{tpu_custom_call.1} parent=23 // pred_fallthru
          _
        %s152 = sand.u32 %s31, 1
        %s153 = scalar_lea.sflag [#allocation5], %s152
        %s154 = sand.u32 %s31, 1
        %s155 = smul.addr %s154, 128
        %s156 = scalar_lea.vmem [#allocation4], %s155
        %p157 = pneg %p44
        %p158 = pneg %p41
        %p159 = pneg %p72
        %p160 = pneg %p69
        %s161 = sand.u32 %s59, 1
        %s162 = scalar_lea.sflag [#allocation6], %s161
        %s163 = sand.u32 %s59, 1
        %s164 = smul.addr %s163, 128
        %s165 = scalar_lea.vmem [#allocation8], %s164
        %p166 = pneg %p93
        %p167 = pneg %p90
        %s168 = ssub.s32 2, %s21
        %s169 = ssub.s32 2, %s21
        %s170 = ssub.s32 2, %s21
        %v171 = vld [vmem:[%s146] sm:$0xff]
        %v172 = vld [vmem:[%s146 + $0x8] sm:$0xff]
        %v173 = vld [vmem:[%s146 + $0x10] sm:$0xff]
        %v174 = vld [vmem:[%s146 + $0x18] sm:$0xff]
        %v175 = vld [vmem:[%s146 + $0x20] sm:$0xff]
        %v176 = vld [vmem:[%s146 + $0x28] sm:$0xff]
        %v177 = vld [vmem:[%s146 + $0x30] sm:$0xff]
        %v178 = vld [vmem:[%s146 + $0x38] sm:$0xff]
        %v179 = vld [vmem:[%s146 + $0x40] sm:$0xff]
        %v180 = vld [vmem:[%s146 + $0x48] sm:$0xff]
        %v181 = vld [vmem:[%s146 + $0x50] sm:$0xff]
        %v182 = vld [vmem:[%s146 + $0x58] sm:$0xff]
        %v183 = vld [vmem:[%s146 + $0x60] sm:$0xff]
        %v184 = vld [vmem:[%s146 + $0x68] sm:$0xff]
        %v185 = vld [vmem:[%s146 + $0x70] sm:$0xff]
        %v186 = vld [vmem:[%s146 + $0x78] sm:$0xff]
        %p187 = scmp.eq.s32.totalorder %s21, 0
        // Predicated region
        $region29: #{tpu_custom_call.1} parent=23 // pred_check
          %p188 = pneg %p187
        $region30: #{tpu_custom_call.1} parent=23 // pred_check_branch
          %190 = sbr.rel (%p188) target = $region32
        $region31: #{tpu_custom_call.1} parent=23 // pred_region
          %191 = vst [vmem:[#allocation2] sm:$0xff] %v171
          %192 = vst [vmem:[#allocation2 + $0x8] sm:$0xff] %v172
          %193 = vst [vmem:[#allocation2 + $0x10] sm:$0xff] %v173
          %194 = vst [vmem:[#allocation2 + $0x18] sm:$0xff] %v174
          %195 = vst [vmem:[#allocation2 + $0x20] sm:$0xff] %v175
          %196 = vst [vmem:[#allocation2 + $0x28] sm:$0xff] %v176
          %197 = vst [vmem:[#allocation2 + $0x30] sm:$0xff] %v177
          %198 = vst [vmem:[#allocation2 + $0x38] sm:$0xff] %v178
          %199 = vst [vmem:[#allocation2 + $0x40] sm:$0xff] %v179
          %200 = vst [vmem:[#allocation2 + $0x48] sm:$0xff] %v180
          %201 = vst [vmem:[#allocation2 + $0x50] sm:$0xff] %v181
          %202 = vst [vmem:[#allocation2 + $0x58] sm:$0xff] %v182
          %203 = vst [vmem:[#allocation2 + $0x60] sm:$0xff] %v183
          %204 = vst [vmem:[#allocation2 + $0x68] sm:$0xff] %v184
          %205 = vst [vmem:[#allocation2 + $0x70] sm:$0xff] %v185
          %206 = vst [vmem:[#allocation2 + $0x78] sm:$0xff] %v186
          %v207 = vlaneseq
          %v208 = vshrl.u32 %v207, 7
          %v209 = vadd.s32 %v208, 8
          %v210 = vadd.s32 %v208, 16
          %v211 = vadd.s32 %v208, 24
          %v212 = vadd.s32 %v208, 32
          %v213 = vadd.s32 %v208, 40
          %v214 = vadd.s32 %v208, 48
          %v215 = vadd.s32 %v208, 56
          %v216 = vadd.s32 %v208, 64
          %v217 = vadd.s32 %v208, 72
          %v218 = vadd.s32 %v208, 80
          %v219 = vadd.s32 %v208, 88
          %v220 = vadd.s32 %v208, 96
          %v221 = vadd.s32 %v208, 104
          %v222 = vadd.s32 %v208, 112
          %v223 = vadd.s32 %v208, 120
          %v224 = vlaneseq
          %v225 = vand.u32 %v224, 127
          %vm226 = vcmp.eq.s32.totalorder %v208, %v225
          %vm227 = vcmp.eq.s32.totalorder %v209, %v225
          %vm228 = vcmp.eq.s32.totalorder %v210, %v225
          %vm229 = vcmp.eq.s32.totalorder %v211, %v225
          %vm230 = vcmp.eq.s32.totalorder %v212, %v225
          %vm231 = vcmp.eq.s32.totalorder %v213, %v225
          %vm232 = vcmp.eq.s32.totalorder %v214, %v225
          %vm233 = vcmp.eq.s32.totalorder %v215, %v225
          %vm234 = vcmp.eq.s32.totalorder %v216, %v225
          %vm235 = vcmp.eq.s32.totalorder %v217, %v225
          %vm236 = vcmp.eq.s32.totalorder %v218, %v225
          %vm237 = vcmp.eq.s32.totalorder %v219, %v225
          %vm238 = vcmp.eq.s32.totalorder %v220, %v225
          %vm239 = vcmp.eq.s32.totalorder %v221, %v225
          %vm240 = vcmp.eq.s32.totalorder %v222, %v225
          %vm241 = vcmp.eq.s32.totalorder %v223, %v225
          %vm242 = vcmp.lt.s32.totalorder %v225, 16
          %vm243 = vmand %vm226, %vm242
          %vm244 = vmand %vm227, %vm242
          %vm245 = vmand %vm228, %vm242
          %vm246 = vmand %vm229, %vm242
          %vm247 = vmand %vm230, %vm242
          %vm248 = vmand %vm231, %vm242
          %vm249 = vmand %vm232, %vm242
          %vm250 = vmand %vm233, %vm242
          %vm251 = vmand %vm234, %vm242
          %vm252 = vmand %vm235, %vm242
          %vm253 = vmand %vm236, %vm242
          %vm254 = vmand %vm237, %vm242
          %vm255 = vmand %vm238, %vm242
          %vm256 = vmand %vm239, %vm242
          %vm257 = vmand %vm240, %vm242
          %vm258 = vmand %vm241, %vm242
          %v259 = vsel %vm243, 1.0, 0.0
          %v260 = vsel %vm244, 1.0, 0.0
          %v261 = vsel %vm245, 1.0, 0.0
          %v262 = vsel %vm246, 1.0, 0.0
          %v263 = vsel %vm247, 1.0, 0.0
          %v264 = vsel %vm248, 1.0, 0.0
          %v265 = vsel %vm249, 1.0, 0.0
          %v266 = vsel %vm250, 1.0, 0.0
          %v267 = vsel %vm251, 1.0, 0.0
          %v268 = vsel %vm252, 1.0, 0.0
          %v269 = vsel %vm253, 1.0, 0.0
          %v270 = vsel %vm254, 1.0, 0.0
          %v271 = vsel %vm255, 1.0, 0.0
          %v272 = vsel %vm256, 1.0, 0.0
          %v273 = vsel %vm257, 1.0, 0.0
          %v274 = vsel %vm258, 1.0, 0.0
          %275 = vst [vmem:[#allocation3] sm:$0xff] %v259
          %276 = vst [vmem:[#allocation3 + $0x8] sm:$0xff] %v260
          %277 = vst [vmem:[#allocation3 + $0x10] sm:$0xff] %v261
          %278 = vst [vmem:[#allocation3 + $0x18] sm:$0xff] %v262
          %279 = vst [vmem:[#allocation3 + $0x20] sm:$0xff] %v263
          %280 = vst [vmem:[#allocation3 + $0x28] sm:$0xff] %v264
          %281 = vst [vmem:[#allocation3 + $0x30] sm:$0xff] %v265
          %282 = vst [vmem:[#allocation3 + $0x38] sm:$0xff] %v266
          %283 = vst [vmem:[#allocation3 + $0x40] sm:$0xff] %v267
          %284 = vst [vmem:[#allocation3 + $0x48] sm:$0xff] %v268
          %285 = vst [vmem:[#allocation3 + $0x50] sm:$0xff] %v269
          %286 = vst [vmem:[#allocation3 + $0x58] sm:$0xff] %v270
          %287 = vst [vmem:[#allocation3 + $0x60] sm:$0xff] %v271
          %288 = vst [vmem:[#allocation3 + $0x68] sm:$0xff] %v272
          %289 = vst [vmem:[#allocation3 + $0x70] sm:$0xff] %v273
          %290 = vst [vmem:[#allocation3 + $0x78] sm:$0xff] %v274
        $region32: #{tpu_custom_call.1} parent=23 // pred_fallthru
          _
        %p291 = scmp.gt.s32.totalorder %s21, 0
        // Predicated region
        $region33: #{tpu_custom_call.1} parent=23 // pred_check
          %p292 = pneg %p291
        $region34: #{tpu_custom_call.1} parent=23 // pred_check_branch
          %294 = sbr.rel (%p292) target = $region36
        $region35: #{tpu_custom_call.1} parent=23 // pred_region
          %v295 = vld [vmem:[#allocation2] sm:$0xff]
          %v296 = vld [vmem:[#allocation2 + $0x8] sm:$0xff]
          %v297 = vld [vmem:[#allocation2 + $0x10] sm:$0xff]
          %v298 = vld [vmem:[#allocation2 + $0x18] sm:$0xff]
          %v299 = vld [vmem:[#allocation2 + $0x20] sm:$0xff]
          %v300 = vld [vmem:[#allocation2 + $0x28] sm:$0xff]
          %v301 = vld [vmem:[#allocation2 + $0x30] sm:$0xff]
          %v302 = vld [vmem:[#allocation2 + $0x38] sm:$0xff]
          %v303 = vld [vmem:[#allocation2 + $0x40] sm:$0xff]
          %v304 = vld [vmem:[#allocation2 + $0x48] sm:$0xff]
          %v305 = vld [vmem:[#allocation2 + $0x50] sm:$0xff]
          %v306 = vld [vmem:[#allocation2 + $0x58] sm:$0xff]
          %v307 = vld [vmem:[#allocation2 + $0x60] sm:$0xff]
          %v308 = vld [vmem:[#allocation2 + $0x68] sm:$0xff]
          %v309 = vld [vmem:[#allocation2 + $0x70] sm:$0xff]
          %v310 = vld [vmem:[#allocation2 + $0x78] sm:$0xff]
          %v311 = vand.u32 %v186, 4294901760
          %312 = vmatpush.msra.mxu0 %v311
          %v313 = vand.u32 %v185, 4294901760
          %314 = vmatpush.msra.mxu0 %v313
          %v315 = vand.u32 %v184, 4294901760
          %316 = vmatpush.msra.mxu0 %v315
          %v317 = vand.u32 %v183, 4294901760
          %318 = vmatpush.msra.mxu0 %v317
          %v319 = vand.u32 %v182, 4294901760
          %320 = vmatpush.msra.mxu0 %v319
          %v321 = vand.u32 %v181, 4294901760
          %322 = vmatpush.msra.mxu0 %v321
          %v323 = vand.u32 %v180, 4294901760
          %324 = vmatpush.msra.mxu0 %v323
          %v325 = vand.u32 %v179, 4294901760
          %326 = vmatpush.msra.mxu0 %v325
          %v327 = vand.u32 %v178, 4294901760
          %328 = vmatpush.msra.mxu0 %v327
          %v329 = vand.u32 %v177, 4294901760
          %330 = vmatpush.msra.mxu0 %v329
          %v331 = vand.u32 %v176, 4294901760
          %332 = vmatpush.msra.mxu0 %v331
          %v333 = vand.u32 %v175, 4294901760
          %334 = vmatpush.msra.mxu0 %v333
          %v335 = vand.u32 %v174, 4294901760
          %336 = vmatpush.msra.mxu0 %v335
          %v337 = vand.u32 %v173, 4294901760
          %338 = vmatpush.msra.mxu0 %v337
          %v339 = vand.u32 %v172, 4294901760
          %340 = vmatpush.msra.mxu0 %v339
          %v341 = vand.u32 %v171, 4294901760
          %342 = vmatpush.msra.mxu0 %v341
          %v343 = vand.u32 %v295, 4294901760
          %v344 = vsub.f32 %v295, %v343
          %v345 = vand.u32 %v344, 4294901760
          %v346 = vsub.f32 %v344, %v345
          %v347 = vand.u32 %v346, 4294901760
          %348 = vmatmul.f32.gmra.mxu0 %v347
          %v349 = vpop.f32.mrf.mxu0
          %v350 = vadd.f32 0.0, %v349
          %v351 = vand.u32 %v296, 4294901760
          %v352 = vsub.f32 %v296, %v351
          %v353 = vand.u32 %v352, 4294901760
          %v354 = vsub.f32 %v352, %v353
          %v355 = vand.u32 %v354, 4294901760
          %356 = vmatmul.f32.gmra.mxu0 %v355
          %v357 = vpop.f32.mrf.mxu0
          %v358 = vadd.f32 0.0, %v357
          %v359 = vand.u32 %v297, 4294901760
          %v360 = vsub.f32 %v297, %v359
          %v361 = vand.u32 %v360, 4294901760
          %v362 = vsub.f32 %v360, %v361
          %v363 = vand.u32 %v362, 4294901760
          %364 = vmatmul.f32.gmra.mxu0 %v363
          %v365 = vpop.f32.mrf.mxu0
          %v366 = vadd.f32 0.0, %v365
          %v367 = vand.u32 %v298, 4294901760
          %v368 = vsub.f32 %v298, %v367
          %v369 = vand.u32 %v368, 4294901760
          %v370 = vsub.f32 %v368, %v369
          %v371 = vand.u32 %v370, 4294901760
          %372 = vmatmul.f32.gmra.mxu0 %v371
          %v373 = vpop.f32.mrf.mxu0
          %v374 = vadd.f32 0.0, %v373
          %v375 = vand.u32 %v299, 4294901760
          %v376 = vsub.f32 %v299, %v375
          %v377 = vand.u32 %v376, 4294901760
          %v378 = vsub.f32 %v376, %v377
          %v379 = vand.u32 %v378, 4294901760
          %380 = vmatmul.f32.gmra.mxu0 %v379
          %v381 = vpop.f32.mrf.mxu0
          %v382 = vadd.f32 0.0, %v381
          %v383 = vand.u32 %v300, 4294901760
          %v384 = vsub.f32 %v300, %v383
          %v385 = vand.u32 %v384, 4294901760
          %v386 = vsub.f32 %v384, %v385
          %v387 = vand.u32 %v386, 4294901760
          %388 = vmatmul.f32.gmra.mxu0 %v387
          %v389 = vpop.f32.mrf.mxu0
          %v390 = vadd.f32 0.0, %v389
          %v391 = vand.u32 %v301, 4294901760
          %v392 = vsub.f32 %v301, %v391
          %v393 = vand.u32 %v392, 4294901760
          %v394 = vsub.f32 %v392, %v393
          %v395 = vand.u32 %v394, 4294901760
          %396 = vmatmul.f32.gmra.mxu0 %v395
          %v397 = vpop.f32.mrf.mxu0
          %v398 = vadd.f32 0.0, %v397
          %v399 = vand.u32 %v302, 4294901760
          %v400 = vsub.f32 %v302, %v399
          %v401 = vand.u32 %v400, 4294901760
          %v402 = vsub.f32 %v400, %v401
          %v403 = vand.u32 %v402, 4294901760
          %404 = vmatmul.f32.gmra.mxu0 %v403
          %v405 = vpop.f32.mrf.mxu0
          %v406 = vadd.f32 0.0, %v405
          %v407 = vand.u32 %v303, 4294901760
          %v408 = vsub.f32 %v303, %v407
          %v409 = vand.u32 %v408, 4294901760
          %v410 = vsub.f32 %v408, %v409
          %v411 = vand.u32 %v410, 4294901760
          %412 = vmatmul.f32.gmra.mxu0 %v411
          %v413 = vpop.f32.mrf.mxu0
          %v414 = vadd.f32 0.0, %v413
          %v415 = vand.u32 %v304, 4294901760
          %v416 = vsub.f32 %v304, %v415
          %v417 = vand.u32 %v416, 4294901760
          %v418 = vsub.f32 %v416, %v417
          %v419 = vand.u32 %v418, 4294901760
          %420 = vmatmul.f32.gmra.mxu0 %v419
          %v421 = vpop.f32.mrf.mxu0
          %v422 = vadd.f32 0.0, %v421
          %v423 = vand.u32 %v305, 4294901760
          %v424 = vsub.f32 %v305, %v423
          %v425 = vand.u32 %v424, 4294901760
          %v426 = vsub.f32 %v424, %v425
          %v427 = vand.u32 %v426, 4294901760
          %428 = vmatmul.f32.gmra.mxu0 %v427
          %v429 = vpop.f32.mrf.mxu0
          %v430 = vadd.f32 0.0, %v429
          %v431 = vand.u32 %v306, 4294901760
          %v432 = vsub.f32 %v306, %v431
          %v433 = vand.u32 %v432, 4294901760
          %v434 = vsub.f32 %v432, %v433
          %v435 = vand.u32 %v434, 4294901760
          %436 = vmatmul.f32.gmra.mxu0 %v435
          %v437 = vpop.f32.mrf.mxu0
          %v438 = vadd.f32 0.0, %v437
          %v439 = vand.u32 %v307, 4294901760
          %v440 = vsub.f32 %v307, %v439
          %v441 = vand.u32 %v440, 4294901760
          %v442 = vsub.f32 %v440, %v441
          %v443 = vand.u32 %v442, 4294901760
          %444 = vmatmul.f32.gmra.mxu0 %v443
          %v445 = vpop.f32.mrf.mxu0
          %v446 = vadd.f32 0.0, %v445
          %v447 = vand.u32 %v308, 4294901760
          %v448 = vsub.f32 %v308, %v447
          %v449 = vand.u32 %v448, 4294901760
          %v450 = vsub.f32 %v448, %v449
          %v451 = vand.u32 %v450, 4294901760
          %452 = vmatmul.f32.gmra.mxu0 %v451
          %v453 = vpop.f32.mrf.mxu0
          %v454 = vadd.f32 0.0, %v453
          %v455 = vand.u32 %v309, 4294901760
          %v456 = vsub.f32 %v309, %v455
          %v457 = vand.u32 %v456, 4294901760
          %v458 = vsub.f32 %v456, %v457
          %v459 = vand.u32 %v458, 4294901760
          %460 = vmatmul.f32.gmra.mxu0 %v459
          %v461 = vpop.f32.mrf.mxu0
          %v462 = vadd.f32 0.0, %v461
          %v463 = vand.u32 %v310, 4294901760
          %v464 = vsub.f32 %v310, %v463
          %v465 = vand.u32 %v464, 4294901760
          %v466 = vsub.f32 %v464, %v465
          %v467 = vand.u32 %v466, 4294901760
          %468 = vmatmul.f32.gmra.mxu0 %v467
          %v469 = vpop.f32.mrf.mxu0
          %v470 = vadd.f32 0.0, %v469
          %471 = vdwg.mxu0
          %v472 = vand.u32 %v186, 4294901760
          %v473 = vsub.f32 %v186, %v472
          %v474 = vand.u32 %v473, 4294901760
          %v475 = vsub.f32 %v473, %v474
          %v476 = vand.u32 %v475, 4294901760
          %477 = vmatpush.msra.mxu0 %v476
          %v478 = vand.u32 %v185, 4294901760
          %v479 = vsub.f32 %v185, %v478
          %v480 = vand.u32 %v479, 4294901760
          %v481 = vsub.f32 %v479, %v480
          %v482 = vand.u32 %v481, 4294901760
          %483 = vmatpush.msra.mxu0 %v482
          %v484 = vand.u32 %v184, 4294901760
          %v485 = vsub.f32 %v184, %v484
          %v486 = vand.u32 %v485, 4294901760
          %v487 = vsub.f32 %v485, %v486
          %v488 = vand.u32 %v487, 4294901760
          %489 = vmatpush.msra.mxu0 %v488
          %v490 = vand.u32 %v183, 4294901760
          %v491 = vsub.f32 %v183, %v490
          %v492 = vand.u32 %v491, 4294901760
          %v493 = vsub.f32 %v491, %v492
          %v494 = vand.u32 %v493, 4294901760
          %495 = vmatpush.msra.mxu0 %v494
          %v496 = vand.u32 %v182, 4294901760
          %v497 = vsub.f32 %v182, %v496
          %v498 = vand.u32 %v497, 4294901760
          %v499 = vsub.f32 %v497, %v498
          %v500 = vand.u32 %v499, 4294901760
          %501 = vmatpush.msra.mxu0 %v500
          %v502 = vand.u32 %v181, 4294901760
          %v503 = vsub.f32 %v181, %v502
          %v504 = vand.u32 %v503, 4294901760
          %v505 = vsub.f32 %v503, %v504
          %v506 = vand.u32 %v505, 4294901760
          %507 = vmatpush.msra.mxu0 %v506
          %v508 = vand.u32 %v180, 4294901760
          %v509 = vsub.f32 %v180, %v508
          %v510 = vand.u32 %v509, 4294901760
          %v511 = vsub.f32 %v509, %v510
          %v512 = vand.u32 %v511, 4294901760
          %513 = vmatpush.msra.mxu0 %v512
          %v514 = vand.u32 %v179, 4294901760
          %v515 = vsub.f32 %v179, %v514
          %v516 = vand.u32 %v515, 4294901760
          %v517 = vsub.f32 %v515, %v516
          %v518 = vand.u32 %v517, 4294901760
          %519 = vmatpush.msra.mxu0 %v518
          %v520 = vand.u32 %v178, 4294901760
          %v521 = vsub.f32 %v178, %v520
          %v522 = vand.u32 %v521, 4294901760
          %v523 = vsub.f32 %v521, %v522
          %v524 = vand.u32 %v523, 4294901760
          %525 = vmatpush.msra.mxu0 %v524
          %v526 = vand.u32 %v177, 4294901760
          %v527 = vsub.f32 %v177, %v526
          %v528 = vand.u32 %v527, 4294901760
          %v529 = vsub.f32 %v527, %v528
          %v530 = vand.u32 %v529, 4294901760
          %531 = vmatpush.msra.mxu0 %v530
          %v532 = vand.u32 %v176, 4294901760
          %v533 = vsub.f32 %v176, %v532
          %v534 = vand.u32 %v533, 4294901760
          %v535 = vsub.f32 %v533, %v534
          %v536 = vand.u32 %v535, 4294901760
          %537 = vmatpush.msra.mxu0 %v536
          %v538 = vand.u32 %v175, 4294901760
          %v539 = vsub.f32 %v175, %v538
          %v540 = vand.u32 %v539, 4294901760
          %v541 = vsub.f32 %v539, %v540
          %v542 = vand.u32 %v541, 4294901760
          %543 = vmatpush.msra.mxu0 %v542
          %v544 = vand.u32 %v174, 4294901760
          %v545 = vsub.f32 %v174, %v544
          %v546 = vand.u32 %v545, 4294901760
          %v547 = vsub.f32 %v545, %v546
          %v548 = vand.u32 %v547, 4294901760
          %549 = vmatpush.msra.mxu0 %v548
          %v550 = vand.u32 %v173, 4294901760
          %v551 = vsub.f32 %v173, %v550
          %v552 = vand.u32 %v551, 4294901760
          %v553 = vsub.f32 %v551, %v552
          %v554 = vand.u32 %v553, 4294901760
          %555 = vmatpush.msra.mxu0 %v554
          %v556 = vand.u32 %v172, 4294901760
          %v557 = vsub.f32 %v172, %v556
          %v558 = vand.u32 %v557, 4294901760
          %v559 = vsub.f32 %v557, %v558
          %v560 = vand.u32 %v559, 4294901760
          %561 = vmatpush.msra.mxu0 %v560
          %v562 = vand.u32 %v171, 4294901760
          %v563 = vsub.f32 %v171, %v562
          %v564 = vand.u32 %v563, 4294901760
          %v565 = vsub.f32 %v563, %v564
          %v566 = vand.u32 %v565, 4294901760
          %567 = vmatpush.msra.mxu0 %v566
          %v568 = vand.u32 %v295, 4294901760
          %569 = vmatmul.f32.gmra.mxu0 %v568
          %v570 = vpop.f32.mrf.mxu0
          %v571 = vadd.f32 %v350, %v570
          %v572 = vand.u32 %v296, 4294901760
          %573 = vmatmul.f32.gmra.mxu0 %v572
          %v574 = vpop.f32.mrf.mxu0
          %v575 = vadd.f32 %v358, %v574
          %v576 = vand.u32 %v297, 4294901760
          %577 = vmatmul.f32.gmra.mxu0 %v576
          %v578 = vpop.f32.mrf.mxu0
          %v579 = vadd.f32 %v366, %v578
          %v580 = vand.u32 %v298, 4294901760
          %581 = vmatmul.f32.gmra.mxu0 %v580
          %v582 = vpop.f32.mrf.mxu0
          %v583 = vadd.f32 %v374, %v582
          %v584 = vand.u32 %v299, 4294901760
          %585 = vmatmul.f32.gmra.mxu0 %v584
          %v586 = vpop.f32.mrf.mxu0
          %v587 = vadd.f32 %v382, %v586
          %v588 = vand.u32 %v300, 4294901760
          %589 = vmatmul.f32.gmra.mxu0 %v588
          %v590 = vpop.f32.mrf.mxu0
          %v591 = vadd.f32 %v390, %v590
          %v592 = vand.u32 %v301, 4294901760
          %593 = vmatmul.f32.gmra.mxu0 %v592
          %v594 = vpop.f32.mrf.mxu0
          %v595 = vadd.f32 %v398, %v594
          %v596 = vand.u32 %v302, 4294901760
          %597 = vmatmul.f32.gmra.mxu0 %v596
          %v598 = vpop.f32.mrf.mxu0
          %v599 = vadd.f32 %v406, %v598
          %v600 = vand.u32 %v303, 4294901760
          %601 = vmatmul.f32.gmra.mxu0 %v600
          %v602 = vpop.f32.mrf.mxu0
          %v603 = vadd.f32 %v414, %v602
          %v604 = vand.u32 %v304, 4294901760
          %605 = vmatmul.f32.gmra.mxu0 %v604
          %v606 = vpop.f32.mrf.mxu0
          %v607 = vadd.f32 %v422, %v606
          %v608 = vand.u32 %v305, 4294901760
          %609 = vmatmul.f32.gmra.mxu0 %v608
          %v610 = vpop.f32.mrf.mxu0
          %v611 = vadd.f32 %v430, %v610
          %v612 = vand.u32 %v306, 4294901760
          %613 = vmatmul.f32.gmra.mxu0 %v612
          %v614 = vpop.f32.mrf.mxu0
          %v615 = vadd.f32 %v438, %v614
          %v616 = vand.u32 %v307, 4294901760
          %617 = vmatmul.f32.gmra.mxu0 %v616
          %v618 = vpop.f32.mrf.mxu0
          %v619 = vadd.f32 %v446, %v618
          %v620 = vand.u32 %v308, 4294901760
          %621 = vmatmul.f32.gmra.mxu0 %v620
          %v622 = vpop.f32.mrf.mxu0
          %v623 = vadd.f32 %v454, %v622
          %v624 = vand.u32 %v309, 4294901760
          %625 = vmatmul.f32.gmra.mxu0 %v624
          %v626 = vpop.f32.mrf.mxu0
          %v627 = vadd.f32 %v462, %v626
          %v628 = vand.u32 %v310, 4294901760
          %629 = vmatmul.f32.gmra.mxu0 %v628
          %v630 = vpop.f32.mrf.mxu0
          %v631 = vadd.f32 %v470, %v630
          %632 = vdwg.mxu0
          %v633 = vand.u32 %v186, 4294901760
          %v634 = vsub.f32 %v186, %v633
          %635 = vmatpush.msra.mxu0 %v634
          %v636 = vand.u32 %v185, 4294901760
          %v637 = vsub.f32 %v185, %v636
          %638 = vmatpush.msra.mxu0 %v637
          %v639 = vand.u32 %v184, 4294901760
          %v640 = vsub.f32 %v184, %v639
          %641 = vmatpush.msra.mxu0 %v640
          %v642 = vand.u32 %v183, 4294901760
          %v643 = vsub.f32 %v183, %v642
          %644 = vmatpush.msra.mxu0 %v643
          %v645 = vand.u32 %v182, 4294901760
          %v646 = vsub.f32 %v182, %v645
          %647 = vmatpush.msra.mxu0 %v646
          %v648 = vand.u32 %v181, 4294901760
          %v649 = vsub.f32 %v181, %v648
          %650 = vmatpush.msra.mxu0 %v649
          %v651 = vand.u32 %v180, 4294901760
          %v652 = vsub.f32 %v180, %v651
          %653 = vmatpush.msra.mxu0 %v652
          %v654 = vand.u32 %v179, 4294901760
          %v655 = vsub.f32 %v179, %v654
          %656 = vmatpush.msra.mxu0 %v655
          %v657 = vand.u32 %v178, 4294901760
          %v658 = vsub.f32 %v178, %v657
          %659 = vmatpush.msra.mxu0 %v658
          %v660 = vand.u32 %v177, 4294901760
          %v661 = vsub.f32 %v177, %v660
          %662 = vmatpush.msra.mxu0 %v661
          %v663 = vand.u32 %v176, 4294901760
          %v664 = vsub.f32 %v176, %v663
          %665 = vmatpush.msra.mxu0 %v664
          %v666 = vand.u32 %v175, 4294901760
          %v667 = vsub.f32 %v175, %v666
          %668 = vmatpush.msra.mxu0 %v667
          %v669 = vand.u32 %v174, 4294901760
          %v670 = vsub.f32 %v174, %v669
          %671 = vmatpush.msra.mxu0 %v670
          %v672 = vand.u32 %v173, 4294901760
          %v673 = vsub.f32 %v173, %v672
          %674 = vmatpush.msra.mxu0 %v673
          %v675 = vand.u32 %v172, 4294901760
          %v676 = vsub.f32 %v172, %v675
          %677 = vmatpush.msra.mxu0 %v676
          %v678 = vand.u32 %v171, 4294901760
          %v679 = vsub.f32 %v171, %v678
          %680 = vmatpush.msra.mxu0 %v679
          %v681 = vand.u32 %v295, 4294901760
          %v682 = vsub.f32 %v295, %v681
          %683 = vmatmul.f32.gmra.mxu0 %v682
          %v684 = vpop.f32.mrf.mxu0
          %v685 = vadd.f32 %v571, %v684
          %v686 = vand.u32 %v296, 4294901760
          %v687 = vsub.f32 %v296, %v686
          %688 = vmatmul.f32.gmra.mxu0 %v687
          %v689 = vpop.f32.mrf.mxu0
          %v690 = vadd.f32 %v575, %v689
          %v691 = vand.u32 %v297, 4294901760
          %v692 = vsub.f32 %v297, %v691
          %693 = vmatmul.f32.gmra.mxu0 %v692
          %v694 = vpop.f32.mrf.mxu0
          %v695 = vadd.f32 %v579, %v694
          %v696 = vand.u32 %v298, 4294901760
          %v697 = vsub.f32 %v298, %v696
          %698 = vmatmul.f32.gmra.mxu0 %v697
          %v699 = vpop.f32.mrf.mxu0
          %v700 = vadd.f32 %v583, %v699
          %v701 = vand.u32 %v299, 4294901760
          %v702 = vsub.f32 %v299, %v701
          %703 = vmatmul.f32.gmra.mxu0 %v702
          %v704 = vpop.f32.mrf.mxu0
          %v705 = vadd.f32 %v587, %v704
          %v706 = vand.u32 %v300, 4294901760
          %v707 = vsub.f32 %v300, %v706
          %708 = vmatmul.f32.gmra.mxu0 %v707
          %v709 = vpop.f32.mrf.mxu0
          %v710 = vadd.f32 %v591, %v709
          %v711 = vand.u32 %v301, 4294901760
          %v712 = vsub.f32 %v301, %v711
          %713 = vmatmul.f32.gmra.mxu0 %v712
          %v714 = vpop.f32.mrf.mxu0
          %v715 = vadd.f32 %v595, %v714
          %v716 = vand.u32 %v302, 4294901760
          %v717 = vsub.f32 %v302, %v716
          %718 = vmatmul.f32.gmra.mxu0 %v717
          %v719 = vpop.f32.mrf.mxu0
          %v720 = vadd.f32 %v599, %v719
          %v721 = vand.u32 %v303, 4294901760
          %v722 = vsub.f32 %v303, %v721
          %723 = vmatmul.f32.gmra.mxu0 %v722
          %v724 = vpop.f32.mrf.mxu0
          %v725 = vadd.f32 %v603, %v724
          %v726 = vand.u32 %v304, 4294901760
          %v727 = vsub.f32 %v304, %v726
          %728 = vmatmul.f32.gmra.mxu0 %v727
          %v729 = vpop.f32.mrf.mxu0
          %v730 = vadd.f32 %v607, %v729
          %v731 = vand.u32 %v305, 4294901760
          %v732 = vsub.f32 %v305, %v731
          %733 = vmatmul.f32.gmra.mxu0 %v732
          %v734 = vpop.f32.mrf.mxu0
          %v735 = vadd.f32 %v611, %v734
          %v736 = vand.u32 %v306, 4294901760
          %v737 = vsub.f32 %v306, %v736
          %738 = vmatmul.f32.gmra.mxu0 %v737
          %v739 = vpop.f32.mrf.mxu0
          %v740 = vadd.f32 %v615, %v739
          %v741 = vand.u32 %v307, 4294901760
          %v742 = vsub.f32 %v307, %v741
          %743 = vmatmul.f32.gmra.mxu0 %v742
          %v744 = vpop.f32.mrf.mxu0
          %v745 = vadd.f32 %v619, %v744
          %v746 = vand.u32 %v308, 4294901760
          %v747 = vsub.f32 %v308, %v746
          %748 = vmatmul.f32.gmra.mxu0 %v747
          %v749 = vpop.f32.mrf.mxu0
          %v750 = vadd.f32 %v623, %v749
          %v751 = vand.u32 %v309, 4294901760
          %v752 = vsub.f32 %v309, %v751
          %753 = vmatmul.f32.gmra.mxu0 %v752
          %v754 = vpop.f32.mrf.mxu0
          %v755 = vadd.f32 %v627, %v754
          %v756 = vand.u32 %v310, 4294901760
          %v757 = vsub.f32 %v310, %v756
          %758 = vmatmul.f32.gmra.mxu0 %v757
          %v759 = vpop.f32.mrf.mxu0
          %v760 = vadd.f32 %v631, %v759
          %761 = vdwg.mxu0
          %v762 = vand.u32 %v186, 4294901760
          %763 = vmatpush.msra.mxu0 %v762
          %v764 = vand.u32 %v185, 4294901760
          %765 = vmatpush.msra.mxu0 %v764
          %v766 = vand.u32 %v184, 4294901760
          %767 = vmatpush.msra.mxu0 %v766
          %v768 = vand.u32 %v183, 4294901760
          %769 = vmatpush.msra.mxu0 %v768
          %v770 = vand.u32 %v182, 4294901760
          %771 = vmatpush.msra.mxu0 %v770
          %v772 = vand.u32 %v181, 4294901760
          %773 = vmatpush.msra.mxu0 %v772
          %v774 = vand.u32 %v180, 4294901760
          %775 = vmatpush.msra.mxu0 %v774
          %v776 = vand.u32 %v179, 4294901760
          %777 = vmatpush.msra.mxu0 %v776
          %v778 = vand.u32 %v178, 4294901760
          %779 = vmatpush.msra.mxu0 %v778
          %v780 = vand.u32 %v177, 4294901760
          %781 = vmatpush.msra.mxu0 %v780
          %v782 = vand.u32 %v176, 4294901760
          %783 = vmatpush.msra.mxu0 %v782
          %v784 = vand.u32 %v175, 4294901760
          %785 = vmatpush.msra.mxu0 %v784
          %v786 = vand.u32 %v174, 4294901760
          %787 = vmatpush.msra.mxu0 %v786
          %v788 = vand.u32 %v173, 4294901760
          %789 = vmatpush.msra.mxu0 %v788
          %v790 = vand.u32 %v172, 4294901760
          %791 = vmatpush.msra.mxu0 %v790
          %v792 = vand.u32 %v171, 4294901760
          %793 = vmatpush.msra.mxu0 %v792
          %v794 = vand.u32 %v295, 4294901760
          %v795 = vsub.f32 %v295, %v794
          %v796 = vand.u32 %v795, 4294901760
          %797 = vmatmul.f32.gmra.mxu0 %v796
          %v798 = vpop.f32.mrf.mxu0
          %v799 = vadd.f32 %v685, %v798
          %v800 = vand.u32 %v296, 4294901760
          %v801 = vsub.f32 %v296, %v800
          %v802 = vand.u32 %v801, 4294901760
          %803 = vmatmul.f32.gmra.mxu0 %v802
          %v804 = vpop.f32.mrf.mxu0
          %v805 = vadd.f32 %v690, %v804
          %v806 = vand.u32 %v297, 4294901760
          %v807 = vsub.f32 %v297, %v806
          %v808 = vand.u32 %v807, 4294901760
          %809 = vmatmul.f32.gmra.mxu0 %v808
          %v810 = vpop.f32.mrf.mxu0
          %v811 = vadd.f32 %v695, %v810
          %v812 = vand.u32 %v298, 4294901760
          %v813 = vsub.f32 %v298, %v812
          %v814 = vand.u32 %v813, 4294901760
          %815 = vmatmul.f32.gmra.mxu0 %v814
          %v816 = vpop.f32.mrf.mxu0
          %v817 = vadd.f32 %v700, %v816
          %v818 = vand.u32 %v299, 4294901760
          %v819 = vsub.f32 %v299, %v818
          %v820 = vand.u32 %v819, 4294901760
          %821 = vmatmul.f32.gmra.mxu0 %v820
          %v822 = vpop.f32.mrf.mxu0
          %v823 = vadd.f32 %v705, %v822
          %v824 = vand.u32 %v300, 4294901760
          %v825 = vsub.f32 %v300, %v824
          %v826 = vand.u32 %v825, 4294901760
          %827 = vmatmul.f32.gmra.mxu0 %v826
          %v828 = vpop.f32.mrf.mxu0
          %v829 = vadd.f32 %v710, %v828
          %v830 = vand.u32 %v301, 4294901760
          %v831 = vsub.f32 %v301, %v830
          %v832 = vand.u32 %v831, 4294901760
          %833 = vmatmul.f32.gmra.mxu0 %v832
          %v834 = vpop.f32.mrf.mxu0
          %v835 = vadd.f32 %v715, %v834
          %v836 = vand.u32 %v302, 4294901760
          %v837 = vsub.f32 %v302, %v836
          %v838 = vand.u32 %v837, 4294901760
          %839 = vmatmul.f32.gmra.mxu0 %v838
          %v840 = vpop.f32.mrf.mxu0
          %v841 = vadd.f32 %v720, %v840
          %v842 = vand.u32 %v303, 4294901760
          %v843 = vsub.f32 %v303, %v842
          %v844 = vand.u32 %v843, 4294901760
          %845 = vmatmul.f32.gmra.mxu0 %v844
          %v846 = vpop.f32.mrf.mxu0
          %v847 = vadd.f32 %v725, %v846
          %v848 = vand.u32 %v304, 4294901760
          %v849 = vsub.f32 %v304, %v848
          %v850 = vand.u32 %v849, 4294901760
          %851 = vmatmul.f32.gmra.mxu0 %v850
          %v852 = vpop.f32.mrf.mxu0
          %v853 = vadd.f32 %v730, %v852
          %v854 = vand.u32 %v305, 4294901760
          %v855 = vsub.f32 %v305, %v854
          %v856 = vand.u32 %v855, 4294901760
          %857 = vmatmul.f32.gmra.mxu0 %v856
          %v858 = vpop.f32.mrf.mxu0
          %v859 = vadd.f32 %v735, %v858
          %v860 = vand.u32 %v306, 4294901760
          %v861 = vsub.f32 %v306, %v860
          %v862 = vand.u32 %v861, 4294901760
          %863 = vmatmul.f32.gmra.mxu0 %v862
          %v864 = vpop.f32.mrf.mxu0
          %v865 = vadd.f32 %v740, %v864
          %v866 = vand.u32 %v307, 4294901760
          %v867 = vsub.f32 %v307, %v866
          %v868 = vand.u32 %v867, 4294901760
          %869 = vmatmul.f32.gmra.mxu0 %v868
          %v870 = vpop.f32.mrf.mxu0
          %v871 = vadd.f32 %v745, %v870
          %v872 = vand.u32 %v308, 4294901760
          %v873 = vsub.f32 %v308, %v872
          %v874 = vand.u32 %v873, 4294901760
          %875 = vmatmul.f32.gmra.mxu0 %v874
          %v876 = vpop.f32.mrf.mxu0
          %v877 = vadd.f32 %v750, %v876
          %v878 = vand.u32 %v309, 4294901760
          %v879 = vsub.f32 %v309, %v878
          %v880 = vand.u32 %v879, 4294901760
          %881 = vmatmul.f32.gmra.mxu0 %v880
          %v882 = vpop.f32.mrf.mxu0
          %v883 = vadd.f32 %v755, %v882
          %v884 = vand.u32 %v310, 4294901760
          %v885 = vsub.f32 %v310, %v884
          %v886 = vand.u32 %v885, 4294901760
          %887 = vmatmul.f32.gmra.mxu0 %v886
          %v888 = vpop.f32.mrf.mxu0
          %v889 = vadd.f32 %v760, %v888
          %890 = vdwg.mxu0
          %v891 = vand.u32 %v186, 4294901760
          %v892 = vsub.f32 %v186, %v891
          %v893 = vand.u32 %v892, 4294901760
          %894 = vmatpush.msra.mxu0 %v893
          %v895 = vand.u32 %v185, 4294901760
          %v896 = vsub.f32 %v185, %v895
          %v897 = vand.u32 %v896, 4294901760
          %898 = vmatpush.msra.mxu0 %v897
          %v899 = vand.u32 %v184, 4294901760
          %v900 = vsub.f32 %v184, %v899
          %v901 = vand.u32 %v900, 4294901760
          %902 = vmatpush.msra.mxu0 %v901
          %v903 = vand.u32 %v183, 4294901760
          %v904 = vsub.f32 %v183, %v903
          %v905 = vand.u32 %v904, 4294901760
          %906 = vmatpush.msra.mxu0 %v905
          %v907 = vand.u32 %v182, 4294901760
          %v908 = vsub.f32 %v182, %v907
          %v909 = vand.u32 %v908, 4294901760
          %910 = vmatpush.msra.mxu0 %v909
          %v911 = vand.u32 %v181, 4294901760
          %v912 = vsub.f32 %v181, %v911
          %v913 = vand.u32 %v912, 4294901760
          %914 = vmatpush.msra.mxu0 %v913
          %v915 = vand.u32 %v180, 4294901760
          %v916 = vsub.f32 %v180, %v915
          %v917 = vand.u32 %v916, 4294901760
          %918 = vmatpush.msra.mxu0 %v917
          %v919 = vand.u32 %v179, 4294901760
          %v920 = vsub.f32 %v179, %v919
          %v921 = vand.u32 %v920, 4294901760
          %922 = vmatpush.msra.mxu0 %v921
          %v923 = vand.u32 %v178, 4294901760
          %v924 = vsub.f32 %v178, %v923
          %v925 = vand.u32 %v924, 4294901760
          %926 = vmatpush.msra.mxu0 %v925
          %v927 = vand.u32 %v177, 4294901760
          %v928 = vsub.f32 %v177, %v927
          %v929 = vand.u32 %v928, 4294901760
          %930 = vmatpush.msra.mxu0 %v929
          %v931 = vand.u32 %v176, 4294901760
          %v932 = vsub.f32 %v176, %v931
          %v933 = vand.u32 %v932, 4294901760
          %934 = vmatpush.msra.mxu0 %v933
          %v935 = vand.u32 %v175, 4294901760
          %v936 = vsub.f32 %v175, %v935
          %v937 = vand.u32 %v936, 4294901760
          %938 = vmatpush.msra.mxu0 %v937
          %v939 = vand.u32 %v174, 4294901760
          %v940 = vsub.f32 %v174, %v939
          %v941 = vand.u32 %v940, 4294901760
          %942 = vmatpush.msra.mxu0 %v941
          %v943 = vand.u32 %v173, 4294901760
          %v944 = vsub.f32 %v173, %v943
          %v945 = vand.u32 %v944, 4294901760
          %946 = vmatpush.msra.mxu0 %v945
          %v947 = vand.u32 %v172, 4294901760
          %v948 = vsub.f32 %v172, %v947
          %v949 = vand.u32 %v948, 4294901760
          %950 = vmatpush.msra.mxu0 %v949
          %v951 = vand.u32 %v171, 4294901760
          %v952 = vsub.f32 %v171, %v951
          %v953 = vand.u32 %v952, 4294901760
          %954 = vmatpush.msra.mxu0 %v953
          %v955 = vand.u32 %v295, 4294901760
          %956 = vmatmul.f32.gmra.mxu0 %v955
          %v957 = vpop.f32.mrf.mxu0
          %v958 = vadd.f32 %v799, %v957
          %v959 = vand.u32 %v296, 4294901760
          %960 = vmatmul.f32.gmra.mxu0 %v959
          %v961 = vpop.f32.mrf.mxu0
          %v962 = vadd.f32 %v805, %v961
          %v963 = vand.u32 %v297, 4294901760
          %964 = vmatmul.f32.gmra.mxu0 %v963
          %v965 = vpop.f32.mrf.mxu0
          %v966 = vadd.f32 %v811, %v965
          %v967 = vand.u32 %v298, 4294901760
          %968 = vmatmul.f32.gmra.mxu0 %v967
          %v969 = vpop.f32.mrf.mxu0
          %v970 = vadd.f32 %v817, %v969
          %v971 = vand.u32 %v299, 4294901760
          %972 = vmatmul.f32.gmra.mxu0 %v971
          %v973 = vpop.f32.mrf.mxu0
          %v974 = vadd.f32 %v823, %v973
          %v975 = vand.u32 %v300, 4294901760
          %976 = vmatmul.f32.gmra.mxu0 %v975
          %v977 = vpop.f32.mrf.mxu0
          %v978 = vadd.f32 %v829, %v977
          %v979 = vand.u32 %v301, 4294901760
          %980 = vmatmul.f32.gmra.mxu0 %v979
          %v981 = vpop.f32.mrf.mxu0
          %v982 = vadd.f32 %v835, %v981
          %v983 = vand.u32 %v302, 4294901760
          %984 = vmatmul.f32.gmra.mxu0 %v983
          %v985 = vpop.f32.mrf.mxu0
          %v986 = vadd.f32 %v841, %v985
          %v987 = vand.u32 %v303, 4294901760
          %988 = vmatmul.f32.gmra.mxu0 %v987
          %v989 = vpop.f32.mrf.mxu0
          %v990 = vadd.f32 %v847, %v989
          %v991 = vand.u32 %v304, 4294901760
          %992 = vmatmul.f32.gmra.mxu0 %v991
          %v993 = vpop.f32.mrf.mxu0
          %v994 = vadd.f32 %v853, %v993
          %v995 = vand.u32 %v305, 4294901760
          %996 = vmatmul.f32.gmra.mxu0 %v995
          %v997 = vpop.f32.mrf.mxu0
          %v998 = vadd.f32 %v859, %v997
          %v999 = vand.u32 %v306, 4294901760
          %1000 = vmatmul.f32.gmra.mxu0 %v999
          %v1001 = vpop.f32.mrf.mxu0
          %v1002 = vadd.f32 %v865, %v1001
          %v1003 = vand.u32 %v307, 4294901760
          %1004 = vmatmul.f32.gmra.mxu0 %v1003
          %v1005 = vpop.f32.mrf.mxu0
          %v1006 = vadd.f32 %v871, %v1005
          %v1007 = vand.u32 %v308, 4294901760
          %1008 = vmatmul.f32.gmra.mxu0 %v1007
          %v1009 = vpop.f32.mrf.mxu0
          %v1010 = vadd.f32 %v877, %v1009
          %v1011 = vand.u32 %v309, 4294901760
          %1012 = vmatmul.f32.gmra.mxu0 %v1011
          %v1013 = vpop.f32.mrf.mxu0
          %v1014 = vadd.f32 %v883, %v1013
          %v1015 = vand.u32 %v310, 4294901760
          %1016 = vmatmul.f32.gmra.mxu0 %v1015
          %v1017 = vpop.f32.mrf.mxu0
          %v1018 = vadd.f32 %v889, %v1017
          %1019 = vdwg.mxu0
          %v1020 = vand.u32 %v186, 4294901760
          %1021 = vmatpush.msra.mxu0 %v1020
          %v1022 = vand.u32 %v185, 4294901760
          %1023 = vmatpush.msra.mxu0 %v1022
          %v1024 = vand.u32 %v184, 4294901760
          %1025 = vmatpush.msra.mxu0 %v1024
          %v1026 = vand.u32 %v183, 4294901760
          %1027 = vmatpush.msra.mxu0 %v1026
          %v1028 = vand.u32 %v182, 4294901760
          %1029 = vmatpush.msra.mxu0 %v1028
          %v1030 = vand.u32 %v181, 4294901760
          %1031 = vmatpush.msra.mxu0 %v1030
          %v1032 = vand.u32 %v180, 4294901760
          %1033 = vmatpush.msra.mxu0 %v1032
          %v1034 = vand.u32 %v179, 4294901760
          %1035 = vmatpush.msra.mxu0 %v1034
          %v1036 = vand.u32 %v178, 4294901760
          %1037 = vmatpush.msra.mxu0 %v1036
          %v1038 = vand.u32 %v177, 4294901760
          %1039 = vmatpush.msra.mxu0 %v1038
          %v1040 = vand.u32 %v176, 4294901760
          %1041 = vmatpush.msra.mxu0 %v1040
          %v1042 = vand.u32 %v175, 4294901760
          %1043 = vmatpush.msra.mxu0 %v1042
          %v1044 = vand.u32 %v174, 4294901760
          %1045 = vmatpush.msra.mxu0 %v1044
          %v1046 = vand.u32 %v173, 4294901760
          %1047 = vmatpush.msra.mxu0 %v1046
          %v1048 = vand.u32 %v172, 4294901760
          %1049 = vmatpush.msra.mxu0 %v1048
          %v1050 = vand.u32 %v171, 4294901760
          %1051 = vmatpush.msra.mxu0 %v1050
          %v1052 = vand.u32 %v295, 4294901760
          %1053 = vmatmul.f32.gmra.mxu0 %v1052
          %v1054 = vpop.f32.mrf.mxu0
          %v1055 = vadd.f32 %v958, %v1054
          %v1056 = vand.u32 %v296, 4294901760
          %1057 = vmatmul.f32.gmra.mxu0 %v1056
          %v1058 = vpop.f32.mrf.mxu0
          %v1059 = vadd.f32 %v962, %v1058
          %v1060 = vand.u32 %v297, 4294901760
          %1061 = vmatmul.f32.gmra.mxu0 %v1060
          %v1062 = vpop.f32.mrf.mxu0
          %v1063 = vadd.f32 %v966, %v1062
          %v1064 = vand.u32 %v298, 4294901760
          %1065 = vmatmul.f32.gmra.mxu0 %v1064
          %v1066 = vpop.f32.mrf.mxu0
          %v1067 = vadd.f32 %v970, %v1066
          %v1068 = vand.u32 %v299, 4294901760
          %1069 = vmatmul.f32.gmra.mxu0 %v1068
          %v1070 = vpop.f32.mrf.mxu0
          %v1071 = vadd.f32 %v974, %v1070
          %v1072 = vand.u32 %v300, 4294901760
          %1073 = vmatmul.f32.gmra.mxu0 %v1072
          %v1074 = vpop.f32.mrf.mxu0
          %v1075 = vadd.f32 %v978, %v1074
          %v1076 = vand.u32 %v301, 4294901760
          %1077 = vmatmul.f32.gmra.mxu0 %v1076
          %v1078 = vpop.f32.mrf.mxu0
          %v1079 = vadd.f32 %v982, %v1078
          %v1080 = vand.u32 %v302, 4294901760
          %1081 = vmatmul.f32.gmra.mxu0 %v1080
          %v1082 = vpop.f32.mrf.mxu0
          %v1083 = vadd.f32 %v986, %v1082
          %v1084 = vand.u32 %v303, 4294901760
          %1085 = vmatmul.f32.gmra.mxu0 %v1084
          %v1086 = vpop.f32.mrf.mxu0
          %v1087 = vadd.f32 %v990, %v1086
          %v1088 = vand.u32 %v304, 4294901760
          %1089 = vmatmul.f32.gmra.mxu0 %v1088
          %v1090 = vpop.f32.mrf.mxu0
          %v1091 = vadd.f32 %v994, %v1090
          %v1092 = vand.u32 %v305, 4294901760
          %1093 = vmatmul.f32.gmra.mxu0 %v1092
          %v1094 = vpop.f32.mrf.mxu0
          %v1095 = vadd.f32 %v998, %v1094
          %v1096 = vand.u32 %v306, 4294901760
          %1097 = vmatmul.f32.gmra.mxu0 %v1096
          %v1098 = vpop.f32.mrf.mxu0
          %v1099 = vadd.f32 %v1002, %v1098
          %v1100 = vand.u32 %v307, 4294901760
          %1101 = vmatmul.f32.gmra.mxu0 %v1100
          %v1102 = vpop.f32.mrf.mxu0
          %v1103 = vadd.f32 %v1006, %v1102
          %v1104 = vand.u32 %v308, 4294901760
          %1105 = vmatmul.f32.gmra.mxu0 %v1104
          %v1106 = vpop.f32.mrf.mxu0
          %v1107 = vadd.f32 %v1010, %v1106
          %v1108 = vand.u32 %v309, 4294901760
          %1109 = vmatmul.f32.gmra.mxu0 %v1108
          %v1110 = vpop.f32.mrf.mxu0
          %v1111 = vadd.f32 %v1014, %v1110
          %v1112 = vand.u32 %v310, 4294901760
          %1113 = vmatmul.f32.gmra.mxu0 %v1112
          %v1114 = vpop.f32.mrf.mxu0
          %v1115 = vadd.f32 %v1018, %v1114
          %1116 = vdwg.mxu0
          %1117 = vst [vmem:[#allocation2] sm:$0xff] %v1055
          %1118 = vst [vmem:[#allocation2 + $0x8] sm:$0xff] %v1059
          %1119 = vst [vmem:[#allocation2 + $0x10] sm:$0xff] %v1063
          %1120 = vst [vmem:[#allocation2 + $0x18] sm:$0xff] %v1067
          %1121 = vst [vmem:[#allocation2 + $0x20] sm:$0xff] %v1071
          %1122 = vst [vmem:[#allocation2 + $0x28] sm:$0xff] %v1075
          %1123 = vst [vmem:[#allocation2 + $0x30] sm:$0xff] %v1079
          %1124 = vst [vmem:[#allocation2 + $0x38] sm:$0xff] %v1083
          %1125 = vst [vmem:[#allocation2 + $0x40] sm:$0xff] %v1087
          %1126 = vst [vmem:[#allocation2 + $0x48] sm:$0xff] %v1091
          %1127 = vst [vmem:[#allocation2 + $0x50] sm:$0xff] %v1095
          %1128 = vst [vmem:[#allocation2 + $0x58] sm:$0xff] %v1099
          %1129 = vst [vmem:[#allocation2 + $0x60] sm:$0xff] %v1103
          %1130 = vst [vmem:[#allocation2 + $0x68] sm:$0xff] %v1107
          %1131 = vst [vmem:[#allocation2 + $0x70] sm:$0xff] %v1111
          %1132 = vst [vmem:[#allocation2 + $0x78] sm:$0xff] %v1115
        $region36: #{tpu_custom_call.1} parent=23 // pred_fallthru
          _
        %v1133 = vld [vmem:[#allocation2] sm:$0xff]
        %v1134 = vld [vmem:[#allocation2 + $0x8] sm:$0xff]
        %v1135 = vld [vmem:[#allocation2 + $0x10] sm:$0xff]
        %v1136 = vld [vmem:[#allocation2 + $0x18] sm:$0xff]
        %v1137 = vld [vmem:[#allocation2 + $0x20] sm:$0xff]
        %v1138 = vld [vmem:[#allocation2 + $0x28] sm:$0xff]
        %v1139 = vld [vmem:[#allocation2 + $0x30] sm:$0xff]
        %v1140 = vld [vmem:[#allocation2 + $0x38] sm:$0xff]
        %v1141 = vld [vmem:[#allocation2 + $0x40] sm:$0xff]
        %v1142 = vld [vmem:[#allocation2 + $0x48] sm:$0xff]
        %v1143 = vld [vmem:[#allocation2 + $0x50] sm:$0xff]
        %v1144 = vld [vmem:[#allocation2 + $0x58] sm:$0xff]
        %v1145 = vld [vmem:[#allocation2 + $0x60] sm:$0xff]
        %v1146 = vld [vmem:[#allocation2 + $0x68] sm:$0xff]
        %v1147 = vld [vmem:[#allocation2 + $0x70] sm:$0xff]
        %v1148 = vld [vmem:[#allocation2 + $0x78] sm:$0xff]
        %1149 = vst [vmem:[%s165] sm:$0xff] %v1133
        %1150 = vst [vmem:[%s165 + $0x8] sm:$0xff] %v1134
        %1151 = vst [vmem:[%s165 + $0x10] sm:$0xff] %v1135
        %1152 = vst [vmem:[%s165 + $0x18] sm:$0xff] %v1136
        %1153 = vst [vmem:[%s165 + $0x20] sm:$0xff] %v1137
        %1154 = vst [vmem:[%s165 + $0x28] sm:$0xff] %v1138
        %1155 = vst [vmem:[%s165 + $0x30] sm:$0xff] %v1139
        %1156 = vst [vmem:[%s165 + $0x38] sm:$0xff] %v1140
        %1157 = vst [vmem:[%s165 + $0x40] sm:$0xff] %v1141
        %1158 = vst [vmem:[%s165 + $0x48] sm:$0xff] %v1142
        %1159 = vst [vmem:[%s165 + $0x50] sm:$0xff] %v1143
        %1160 = vst [vmem:[%s165 + $0x58] sm:$0xff] %v1144
        %1161 = vst [vmem:[%s165 + $0x60] sm:$0xff] %v1145
        %1162 = vst [vmem:[%s165 + $0x68] sm:$0xff] %v1146
        %1163 = vst [vmem:[%s165 + $0x70] sm:$0xff] %v1147
        %1164 = vst [vmem:[%s165 + $0x78] sm:$0xff] %v1148
        %v1165 = vand.u32 %v1148, 4294901760
        %1166 = vmatpush.xpose.msra.mxu0 %v1165
        %v1167 = vand.u32 %v1147, 4294901760
        %1168 = vmatpush.xpose.msra.mxu0 %v1167
        %v1169 = vand.u32 %v1146, 4294901760
        %1170 = vmatpush.xpose.msra.mxu0 %v1169
        %v1171 = vand.u32 %v1145, 4294901760
        %1172 = vmatpush.xpose.msra.mxu0 %v1171
        %v1173 = vand.u32 %v1144, 4294901760
        %1174 = vmatpush.xpose.msra.mxu0 %v1173
        %v1175 = vand.u32 %v1143, 4294901760
        %1176 = vmatpush.xpose.msra.mxu0 %v1175
        %v1177 = vand.u32 %v1142, 4294901760
        %1178 = vmatpush.xpose.msra.mxu0 %v1177
        %v1179 = vand.u32 %v1141, 4294901760
        %1180 = vmatpush.xpose.msra.mxu0 %v1179
        %v1181 = vand.u32 %v1140, 4294901760
        %1182 = vmatpush.xpose.msra.mxu0 %v1181
        %v1183 = vand.u32 %v1139, 4294901760
        %1184 = vmatpush.xpose.msra.mxu0 %v1183
        %v1185 = vand.u32 %v1138, 4294901760
        %1186 = vmatpush.xpose.msra.mxu0 %v1185
        %v1187 = vand.u32 %v1137, 4294901760
        %1188 = vmatpush.xpose.msra.mxu0 %v1187
        %v1189 = vand.u32 %v1136, 4294901760
        %1190 = vmatpush.xpose.msra.mxu0 %v1189
        %v1191 = vand.u32 %v1135, 4294901760
        %1192 = vmatpush.xpose.msra.mxu0 %v1191
        %v1193 = vand.u32 %v1134, 4294901760
        %1194 = vmatpush.xpose.msra.mxu0 %v1193
        %v1195 = vand.u32 %v1133, 4294901760
        %1196 = vmatpush.xpose.msra.mxu0 %v1195
        %v1197 = vand.u32 %v1133, 4294901760
        %v1198 = vsub.f32 %v1133, %v1197
        %v1199 = vand.u32 %v1198, 4294901760
        %v1200 = vsub.f32 %v1198, %v1199
        %v1201 = vand.u32 %v1200, 4294901760
        %1202 = vmatmul.f32.gmra.mxu0 %v1201
        %v1203 = vpop.f32.mrf.mxu0
        %v1204 = vadd.f32 0.0, %v1203
        %v1205 = vand.u32 %v1134, 4294901760
        %v1206 = vsub.f32 %v1134, %v1205
        %v1207 = vand.u32 %v1206, 4294901760
        %v1208 = vsub.f32 %v1206, %v1207
        %v1209 = vand.u32 %v1208, 4294901760
        %1210 = vmatmul.f32.gmra.mxu0 %v1209
        %v1211 = vpop.f32.mrf.mxu0
        %v1212 = vadd.f32 0.0, %v1211
        %v1213 = vand.u32 %v1135, 4294901760
        %v1214 = vsub.f32 %v1135, %v1213
        %v1215 = vand.u32 %v1214, 4294901760
        %v1216 = vsub.f32 %v1214, %v1215
        %v1217 = vand.u32 %v1216, 4294901760
        %1218 = vmatmul.f32.gmra.mxu0 %v1217
        %v1219 = vpop.f32.mrf.mxu0
        %v1220 = vadd.f32 0.0, %v1219
        %v1221 = vand.u32 %v1136, 4294901760
        %v1222 = vsub.f32 %v1136, %v1221
        %v1223 = vand.u32 %v1222, 4294901760
        %v1224 = vsub.f32 %v1222, %v1223
        %v1225 = vand.u32 %v1224, 4294901760
        %1226 = vmatmul.f32.gmra.mxu0 %v1225
        %v1227 = vpop.f32.mrf.mxu0
        %v1228 = vadd.f32 0.0, %v1227
        %v1229 = vand.u32 %v1137, 4294901760
        %v1230 = vsub.f32 %v1137, %v1229
        %v1231 = vand.u32 %v1230, 4294901760
        %v1232 = vsub.f32 %v1230, %v1231
        %v1233 = vand.u32 %v1232, 4294901760
        %1234 = vmatmul.f32.gmra.mxu0 %v1233
        %v1235 = vpop.f32.mrf.mxu0
        %v1236 = vadd.f32 0.0, %v1235
        %v1237 = vand.u32 %v1138, 4294901760
        %v1238 = vsub.f32 %v1138, %v1237
        %v1239 = vand.u32 %v1238, 4294901760
        %v1240 = vsub.f32 %v1238, %v1239
        %v1241 = vand.u32 %v1240, 4294901760
        %1242 = vmatmul.f32.gmra.mxu0 %v1241
        %v1243 = vpop.f32.mrf.mxu0
        %v1244 = vadd.f32 0.0, %v1243
        %v1245 = vand.u32 %v1139, 4294901760
        %v1246 = vsub.f32 %v1139, %v1245
        %v1247 = vand.u32 %v1246, 4294901760
        %v1248 = vsub.f32 %v1246, %v1247
        %v1249 = vand.u32 %v1248, 4294901760
        %1250 = vmatmul.f32.gmra.mxu0 %v1249
        %v1251 = vpop.f32.mrf.mxu0
        %v1252 = vadd.f32 0.0, %v1251
        %v1253 = vand.u32 %v1140, 4294901760
        %v1254 = vsub.f32 %v1140, %v1253
        %v1255 = vand.u32 %v1254, 4294901760
        %v1256 = vsub.f32 %v1254, %v1255
        %v1257 = vand.u32 %v1256, 4294901760
        %1258 = vmatmul.f32.gmra.mxu0 %v1257
        %v1259 = vpop.f32.mrf.mxu0
        %v1260 = vadd.f32 0.0, %v1259
        %v1261 = vand.u32 %v1141, 4294901760
        %v1262 = vsub.f32 %v1141, %v1261
        %v1263 = vand.u32 %v1262, 4294901760
        %v1264 = vsub.f32 %v1262, %v1263
        %v1265 = vand.u32 %v1264, 4294901760
        %1266 = vmatmul.f32.gmra.mxu0 %v1265
        %v1267 = vpop.f32.mrf.mxu0
        %v1268 = vadd.f32 0.0, %v1267
        %v1269 = vand.u32 %v1142, 4294901760
        %v1270 = vsub.f32 %v1142, %v1269
        %v1271 = vand.u32 %v1270, 4294901760
        %v1272 = vsub.f32 %v1270, %v1271
        %v1273 = vand.u32 %v1272, 4294901760
        %1274 = vmatmul.f32.gmra.mxu0 %v1273
        %v1275 = vpop.f32.mrf.mxu0
        %v1276 = vadd.f32 0.0, %v1275
        %v1277 = vand.u32 %v1143, 4294901760
        %v1278 = vsub.f32 %v1143, %v1277
        %v1279 = vand.u32 %v1278, 4294901760
        %v1280 = vsub.f32 %v1278, %v1279
        %v1281 = vand.u32 %v1280, 4294901760
        %1282 = vmatmul.f32.gmra.mxu0 %v1281
        %v1283 = vpop.f32.mrf.mxu0
        %v1284 = vadd.f32 0.0, %v1283
        %v1285 = vand.u32 %v1144, 4294901760
        %v1286 = vsub.f32 %v1144, %v1285
        %v1287 = vand.u32 %v1286, 4294901760
        %v1288 = vsub.f32 %v1286, %v1287
        %v1289 = vand.u32 %v1288, 4294901760
        %1290 = vmatmul.f32.gmra.mxu0 %v1289
        %v1291 = vpop.f32.mrf.mxu0
        %v1292 = vadd.f32 0.0, %v1291
        %v1293 = vand.u32 %v1145, 4294901760
        %v1294 = vsub.f32 %v1145, %v1293
        %v1295 = vand.u32 %v1294, 4294901760
        %v1296 = vsub.f32 %v1294, %v1295
        %v1297 = vand.u32 %v1296, 4294901760
        %1298 = vmatmul.f32.gmra.mxu0 %v1297
        %v1299 = vpop.f32.mrf.mxu0
        %v1300 = vadd.f32 0.0, %v1299
        %v1301 = vand.u32 %v1146, 4294901760
        %v1302 = vsub.f32 %v1146, %v1301
        %v1303 = vand.u32 %v1302, 4294901760
        %v1304 = vsub.f32 %v1302, %v1303
        %v1305 = vand.u32 %v1304, 4294901760
        %1306 = vmatmul.f32.gmra.mxu0 %v1305
        %v1307 = vpop.f32.mrf.mxu0
        %v1308 = vadd.f32 0.0, %v1307
        %v1309 = vand.u32 %v1147, 4294901760
        %v1310 = vsub.f32 %v1147, %v1309
        %v1311 = vand.u32 %v1310, 4294901760
        %v1312 = vsub.f32 %v1310, %v1311
        %v1313 = vand.u32 %v1312, 4294901760
        %1314 = vmatmul.f32.gmra.mxu0 %v1313
        %v1315 = vpop.f32.mrf.mxu0
        %v1316 = vadd.f32 0.0, %v1315
        %v1317 = vand.u32 %v1148, 4294901760
        %v1318 = vsub.f32 %v1148, %v1317
        %v1319 = vand.u32 %v1318, 4294901760
        %v1320 = vsub.f32 %v1318, %v1319
        %v1321 = vand.u32 %v1320, 4294901760
        %1322 = vmatmul.f32.gmra.mxu0 %v1321
        %v1323 = vpop.f32.mrf.mxu0
        %v1324 = vadd.f32 0.0, %v1323
        %1325 = vdwg.mxu0
        %v1326 = vand.u32 %v1148, 4294901760
        %v1327 = vsub.f32 %v1148, %v1326
        %v1328 = vand.u32 %v1327, 4294901760
        %v1329 = vsub.f32 %v1327, %v1328
        %v1330 = vand.u32 %v1329, 4294901760
        %1331 = vmatpush.xpose.msra.mxu0 %v1330
        %v1332 = vand.u32 %v1147, 4294901760
        %v1333 = vsub.f32 %v1147, %v1332
        %v1334 = vand.u32 %v1333, 4294901760
        %v1335 = vsub.f32 %v1333, %v1334
        %v1336 = vand.u32 %v1335, 4294901760
        %1337 = vmatpush.xpose.msra.mxu0 %v1336
        %v1338 = vand.u32 %v1146, 4294901760
        %v1339 = vsub.f32 %v1146, %v1338
        %v1340 = vand.u32 %v1339, 4294901760
        %v1341 = vsub.f32 %v1339, %v1340
        %v1342 = vand.u32 %v1341, 4294901760
        %1343 = vmatpush.xpose.msra.mxu0 %v1342
        %v1344 = vand.u32 %v1145, 4294901760
        %v1345 = vsub.f32 %v1145, %v1344
        %v1346 = vand.u32 %v1345, 4294901760
        %v1347 = vsub.f32 %v1345, %v1346
        %v1348 = vand.u32 %v1347, 4294901760
        %1349 = vmatpush.xpose.msra.mxu0 %v1348
        %v1350 = vand.u32 %v1144, 4294901760
        %v1351 = vsub.f32 %v1144, %v1350
        %v1352 = vand.u32 %v1351, 4294901760
        %v1353 = vsub.f32 %v1351, %v1352
        %v1354 = vand.u32 %v1353, 4294901760
        %1355 = vmatpush.xpose.msra.mxu0 %v1354
        %v1356 = vand.u32 %v1143, 4294901760
        %v1357 = vsub.f32 %v1143, %v1356
        %v1358 = vand.u32 %v1357, 4294901760
        %v1359 = vsub.f32 %v1357, %v1358
        %v1360 = vand.u32 %v1359, 4294901760
        %1361 = vmatpush.xpose.msra.mxu0 %v1360
        %v1362 = vand.u32 %v1142, 4294901760
        %v1363 = vsub.f32 %v1142, %v1362
        %v1364 = vand.u32 %v1363, 4294901760
        %v1365 = vsub.f32 %v1363, %v1364
        %v1366 = vand.u32 %v1365, 4294901760
        %1367 = vmatpush.xpose.msra.mxu0 %v1366
        %v1368 = vand.u32 %v1141, 4294901760
        %v1369 = vsub.f32 %v1141, %v1368
        %v1370 = vand.u32 %v1369, 4294901760
        %v1371 = vsub.f32 %v1369, %v1370
        %v1372 = vand.u32 %v1371, 4294901760
        %1373 = vmatpush.xpose.msra.mxu0 %v1372
        %v1374 = vand.u32 %v1140, 4294901760
        %v1375 = vsub.f32 %v1140, %v1374
        %v1376 = vand.u32 %v1375, 4294901760
        %v1377 = vsub.f32 %v1375, %v1376
        %v1378 = vand.u32 %v1377, 4294901760
        %1379 = vmatpush.xpose.msra.mxu0 %v1378
        %v1380 = vand.u32 %v1139, 4294901760
        %v1381 = vsub.f32 %v1139, %v1380
        %v1382 = vand.u32 %v1381, 4294901760
        %v1383 = vsub.f32 %v1381, %v1382
        %v1384 = vand.u32 %v1383, 4294901760
        %1385 = vmatpush.xpose.msra.mxu0 %v1384
        %v1386 = vand.u32 %v1138, 4294901760
        %v1387 = vsub.f32 %v1138, %v1386
        %v1388 = vand.u32 %v1387, 4294901760
        %v1389 = vsub.f32 %v1387, %v1388
        %v1390 = vand.u32 %v1389, 4294901760
        %1391 = vmatpush.xpose.msra.mxu0 %v1390
        %v1392 = vand.u32 %v1137, 4294901760
        %v1393 = vsub.f32 %v1137, %v1392
        %v1394 = vand.u32 %v1393, 4294901760
        %v1395 = vsub.f32 %v1393, %v1394
        %v1396 = vand.u32 %v1395, 4294901760
        %1397 = vmatpush.xpose.msra.mxu0 %v1396
        %v1398 = vand.u32 %v1136, 4294901760
        %v1399 = vsub.f32 %v1136, %v1398
        %v1400 = vand.u32 %v1399, 4294901760
        %v1401 = vsub.f32 %v1399, %v1400
        %v1402 = vand.u32 %v1401, 4294901760
        %1403 = vmatpush.xpose.msra.mxu0 %v1402
        %v1404 = vand.u32 %v1135, 4294901760
        %v1405 = vsub.f32 %v1135, %v1404
        %v1406 = vand.u32 %v1405, 4294901760
        %v1407 = vsub.f32 %v1405, %v1406
        %v1408 = vand.u32 %v1407, 4294901760
        %1409 = vmatpush.xpose.msra.mxu0 %v1408
        %v1410 = vand.u32 %v1134, 4294901760
        %v1411 = vsub.f32 %v1134, %v1410
        %v1412 = vand.u32 %v1411, 4294901760
        %v1413 = vsub.f32 %v1411, %v1412
        %v1414 = vand.u32 %v1413, 4294901760
        %1415 = vmatpush.xpose.msra.mxu0 %v1414
        %v1416 = vand.u32 %v1133, 4294901760
        %v1417 = vsub.f32 %v1133, %v1416
        %v1418 = vand.u32 %v1417, 4294901760
        %v1419 = vsub.f32 %v1417, %v1418
        %v1420 = vand.u32 %v1419, 4294901760
        %1421 = vmatpush.xpose.msra.mxu0 %v1420
        %v1422 = vand.u32 %v1133, 4294901760
        %1423 = vmatmul.f32.gmra.mxu0 %v1422
        %v1424 = vpop.f32.mrf.mxu0
        %v1425 = vadd.f32 %v1204, %v1424
        %v1426 = vand.u32 %v1134, 4294901760
        %1427 = vmatmul.f32.gmra.mxu0 %v1426
        %v1428 = vpop.f32.mrf.mxu0
        %v1429 = vadd.f32 %v1212, %v1428
        %v1430 = vand.u32 %v1135, 4294901760
        %1431 = vmatmul.f32.gmra.mxu0 %v1430
        %v1432 = vpop.f32.mrf.mxu0
        %v1433 = vadd.f32 %v1220, %v1432
        %v1434 = vand.u32 %v1136, 4294901760
        %1435 = vmatmul.f32.gmra.mxu0 %v1434
        %v1436 = vpop.f32.mrf.mxu0
        %v1437 = vadd.f32 %v1228, %v1436
        %v1438 = vand.u32 %v1137, 4294901760
        %1439 = vmatmul.f32.gmra.mxu0 %v1438
        %v1440 = vpop.f32.mrf.mxu0
        %v1441 = vadd.f32 %v1236, %v1440
        %v1442 = vand.u32 %v1138, 4294901760
        %1443 = vmatmul.f32.gmra.mxu0 %v1442
        %v1444 = vpop.f32.mrf.mxu0
        %v1445 = vadd.f32 %v1244, %v1444
        %v1446 = vand.u32 %v1139, 4294901760
        %1447 = vmatmul.f32.gmra.mxu0 %v1446
        %v1448 = vpop.f32.mrf.mxu0
        %v1449 = vadd.f32 %v1252, %v1448
        %v1450 = vand.u32 %v1140, 4294901760
        %1451 = vmatmul.f32.gmra.mxu0 %v1450
        %v1452 = vpop.f32.mrf.mxu0
        %v1453 = vadd.f32 %v1260, %v1452
        %v1454 = vand.u32 %v1141, 4294901760
        %1455 = vmatmul.f32.gmra.mxu0 %v1454
        %v1456 = vpop.f32.mrf.mxu0
        %v1457 = vadd.f32 %v1268, %v1456
        %v1458 = vand.u32 %v1142, 4294901760
        %1459 = vmatmul.f32.gmra.mxu0 %v1458
        %v1460 = vpop.f32.mrf.mxu0
        %v1461 = vadd.f32 %v1276, %v1460
        %v1462 = vand.u32 %v1143, 4294901760
        %1463 = vmatmul.f32.gmra.mxu0 %v1462
        %v1464 = vpop.f32.mrf.mxu0
        %v1465 = vadd.f32 %v1284, %v1464
        %v1466 = vand.u32 %v1144, 4294901760
        %1467 = vmatmul.f32.gmra.mxu0 %v1466
        %v1468 = vpop.f32.mrf.mxu0
        %v1469 = vadd.f32 %v1292, %v1468
        %v1470 = vand.u32 %v1145, 4294901760
        %1471 = vmatmul.f32.gmra.mxu0 %v1470
        %v1472 = vpop.f32.mrf.mxu0
        %v1473 = vadd.f32 %v1300, %v1472
        %v1474 = vand.u32 %v1146, 4294901760
        %1475 = vmatmul.f32.gmra.mxu0 %v1474
        %v1476 = vpop.f32.mrf.mxu0
        %v1477 = vadd.f32 %v1308, %v1476
        %v1478 = vand.u32 %v1147, 4294901760
        %1479 = vmatmul.f32.gmra.mxu0 %v1478
        %v1480 = vpop.f32.mrf.mxu0
        %v1481 = vadd.f32 %v1316, %v1480
        %v1482 = vand.u32 %v1148, 4294901760
        %1483 = vmatmul.f32.gmra.mxu0 %v1482
        %v1484 = vpop.f32.mrf.mxu0
        %v1485 = vadd.f32 %v1324, %v1484
        %1486 = vdwg.mxu0
        %v1487 = vand.u32 %v1148, 4294901760
        %v1488 = vsub.f32 %v1148, %v1487
        %1489 = vmatpush.xpose.msra.mxu0 %v1488
        %v1490 = vand.u32 %v1147, 4294901760
        %v1491 = vsub.f32 %v1147, %v1490
        %1492 = vmatpush.xpose.msra.mxu0 %v1491
        %v1493 = vand.u32 %v1146, 4294901760
        %v1494 = vsub.f32 %v1146, %v1493
        %1495 = vmatpush.xpose.msra.mxu0 %v1494
        %v1496 = vand.u32 %v1145, 4294901760
        %v1497 = vsub.f32 %v1145, %v1496
        %1498 = vmatpush.xpose.msra.mxu0 %v1497
        %v1499 = vand.u32 %v1144, 4294901760
        %v1500 = vsub.f32 %v1144, %v1499
        %1501 = vmatpush.xpose.msra.mxu0 %v1500
        %v1502 = vand.u32 %v1143, 4294901760
        %v1503 = vsub.f32 %v1143, %v1502
        %1504 = vmatpush.xpose.msra.mxu0 %v1503
        %v1505 = vand.u32 %v1142, 4294901760
        %v1506 = vsub.f32 %v1142, %v1505
        %1507 = vmatpush.xpose.msra.mxu0 %v1506
        %v1508 = vand.u32 %v1141, 4294901760
        %v1509 = vsub.f32 %v1141, %v1508
        %1510 = vmatpush.xpose.msra.mxu0 %v1509
        %v1511 = vand.u32 %v1140, 4294901760
        %v1512 = vsub.f32 %v1140, %v1511
        %1513 = vmatpush.xpose.msra.mxu0 %v1512
        %v1514 = vand.u32 %v1139, 4294901760
        %v1515 = vsub.f32 %v1139, %v1514
        %1516 = vmatpush.xpose.msra.mxu0 %v1515
        %v1517 = vand.u32 %v1138, 4294901760
        %v1518 = vsub.f32 %v1138, %v1517
        %1519 = vmatpush.xpose.msra.mxu0 %v1518
        %v1520 = vand.u32 %v1137, 4294901760
        %v1521 = vsub.f32 %v1137, %v1520
        %1522 = vmatpush.xpose.msra.mxu0 %v1521
        %v1523 = vand.u32 %v1136, 4294901760
        %v1524 = vsub.f32 %v1136, %v1523
        %1525 = vmatpush.xpose.msra.mxu0 %v1524
        %v1526 = vand.u32 %v1135, 4294901760
        %v1527 = vsub.f32 %v1135, %v1526
        %1528 = vmatpush.xpose.msra.mxu0 %v1527
        %v1529 = vand.u32 %v1134, 4294901760
        %v1530 = vsub.f32 %v1134, %v1529
        %1531 = vmatpush.xpose.msra.mxu0 %v1530
        %v1532 = vand.u32 %v1133, 4294901760
        %v1533 = vsub.f32 %v1133, %v1532
        %1534 = vmatpush.xpose.msra.mxu0 %v1533
        %v1535 = vand.u32 %v1133, 4294901760
        %v1536 = vsub.f32 %v1133, %v1535
        %1537 = vmatmul.f32.gmra.mxu0 %v1536
        %v1538 = vpop.f32.mrf.mxu0
        %v1539 = vadd.f32 %v1425, %v1538
        %v1540 = vand.u32 %v1134, 4294901760
        %v1541 = vsub.f32 %v1134, %v1540
        %1542 = vmatmul.f32.gmra.mxu0 %v1541
        %v1543 = vpop.f32.mrf.mxu0
        %v1544 = vadd.f32 %v1429, %v1543
        %v1545 = vand.u32 %v1135, 4294901760
        %v1546 = vsub.f32 %v1135, %v1545
        %1547 = vmatmul.f32.gmra.mxu0 %v1546
        %v1548 = vpop.f32.mrf.mxu0
        %v1549 = vadd.f32 %v1433, %v1548
        %v1550 = vand.u32 %v1136, 4294901760
        %v1551 = vsub.f32 %v1136, %v1550
        %1552 = vmatmul.f32.gmra.mxu0 %v1551
        %v1553 = vpop.f32.mrf.mxu0
        %v1554 = vadd.f32 %v1437, %v1553
        %v1555 = vand.u32 %v1137, 4294901760
        %v1556 = vsub.f32 %v1137, %v1555
        %1557 = vmatmul.f32.gmra.mxu0 %v1556
        %v1558 = vpop.f32.mrf.mxu0
        %v1559 = vadd.f32 %v1441, %v1558
        %v1560 = vand.u32 %v1138, 4294901760
        %v1561 = vsub.f32 %v1138, %v1560
        %1562 = vmatmul.f32.gmra.mxu0 %v1561
        %v1563 = vpop.f32.mrf.mxu0
        %v1564 = vadd.f32 %v1445, %v1563
        %v1565 = vand.u32 %v1139, 4294901760
        %v1566 = vsub.f32 %v1139, %v1565
        %1567 = vmatmul.f32.gmra.mxu0 %v1566
        %v1568 = vpop.f32.mrf.mxu0
        %v1569 = vadd.f32 %v1449, %v1568
        %v1570 = vand.u32 %v1140, 4294901760
        %v1571 = vsub.f32 %v1140, %v1570
        %1572 = vmatmul.f32.gmra.mxu0 %v1571
        %v1573 = vpop.f32.mrf.mxu0
        %v1574 = vadd.f32 %v1453, %v1573
        %v1575 = vand.u32 %v1141, 4294901760
        %v1576 = vsub.f32 %v1141, %v1575
        %1577 = vmatmul.f32.gmra.mxu0 %v1576
        %v1578 = vpop.f32.mrf.mxu0
        %v1579 = vadd.f32 %v1457, %v1578
        %v1580 = vand.u32 %v1142, 4294901760
        %v1581 = vsub.f32 %v1142, %v1580
        %1582 = vmatmul.f32.gmra.mxu0 %v1581
        %v1583 = vpop.f32.mrf.mxu0
        %v1584 = vadd.f32 %v1461, %v1583
        %v1585 = vand.u32 %v1143, 4294901760
        %v1586 = vsub.f32 %v1143, %v1585
        %1587 = vmatmul.f32.gmra.mxu0 %v1586
        %v1588 = vpop.f32.mrf.mxu0
        %v1589 = vadd.f32 %v1465, %v1588
        %v1590 = vand.u32 %v1144, 4294901760
        %v1591 = vsub.f32 %v1144, %v1590
        %1592 = vmatmul.f32.gmra.mxu0 %v1591
        %v1593 = vpop.f32.mrf.mxu0
        %v1594 = vadd.f32 %v1469, %v1593
        %v1595 = vand.u32 %v1145, 4294901760
        %v1596 = vsub.f32 %v1145, %v1595
        %1597 = vmatmul.f32.gmra.mxu0 %v1596
        %v1598 = vpop.f32.mrf.mxu0
        %v1599 = vadd.f32 %v1473, %v1598
        %v1600 = vand.u32 %v1146, 4294901760
        %v1601 = vsub.f32 %v1146, %v1600
        %1602 = vmatmul.f32.gmra.mxu0 %v1601
        %v1603 = vpop.f32.mrf.mxu0
        %v1604 = vadd.f32 %v1477, %v1603
        %v1605 = vand.u32 %v1147, 4294901760
        %v1606 = vsub.f32 %v1147, %v1605
        %1607 = vmatmul.f32.gmra.mxu0 %v1606
        %v1608 = vpop.f32.mrf.mxu0
        %v1609 = vadd.f32 %v1481, %v1608
        %v1610 = vand.u32 %v1148, 4294901760
        %v1611 = vsub.f32 %v1148, %v1610
        %1612 = vmatmul.f32.gmra.mxu0 %v1611
        %v1613 = vpop.f32.mrf.mxu0
        %v1614 = vadd.f32 %v1485, %v1613
        %1615 = vdwg.mxu0
        %v1616 = vand.u32 %v1148, 4294901760
        %1617 = vmatpush.xpose.msra.mxu0 %v1616
        %v1618 = vand.u32 %v1147, 4294901760
        %1619 = vmatpush.xpose.msra.mxu0 %v1618
        %v1620 = vand.u32 %v1146, 4294901760
        %1621 = vmatpush.xpose.msra.mxu0 %v1620
        %v1622 = vand.u32 %v1145, 4294901760
        %1623 = vmatpush.xpose.msra.mxu0 %v1622
        %v1624 = vand.u32 %v1144, 4294901760
        %1625 = vmatpush.xpose.msra.mxu0 %v1624
        %v1626 = vand.u32 %v1143, 4294901760
        %1627 = vmatpush.xpose.msra.mxu0 %v1626
        %v1628 = vand.u32 %v1142, 4294901760
        %1629 = vmatpush.xpose.msra.mxu0 %v1628
        %v1630 = vand.u32 %v1141, 4294901760
        %1631 = vmatpush.xpose.msra.mxu0 %v1630
        %v1632 = vand.u32 %v1140, 4294901760
        %1633 = vmatpush.xpose.msra.mxu0 %v1632
        %v1634 = vand.u32 %v1139, 4294901760
        %1635 = vmatpush.xpose.msra.mxu0 %v1634
        %v1636 = vand.u32 %v1138, 4294901760
        %1637 = vmatpush.xpose.msra.mxu0 %v1636
        %v1638 = vand.u32 %v1137, 4294901760
        %1639 = vmatpush.xpose.msra.mxu0 %v1638
        %v1640 = vand.u32 %v1136, 4294901760
        %1641 = vmatpush.xpose.msra.mxu0 %v1640
        %v1642 = vand.u32 %v1135, 4294901760
        %1643 = vmatpush.xpose.msra.mxu0 %v1642
        %v1644 = vand.u32 %v1134, 4294901760
        %1645 = vmatpush.xpose.msra.mxu0 %v1644
        %v1646 = vand.u32 %v1133, 4294901760
        %1647 = vmatpush.xpose.msra.mxu0 %v1646
        %v1648 = vand.u32 %v1133, 4294901760
        %v1649 = vsub.f32 %v1133, %v1648
        %v1650 = vand.u32 %v1649, 4294901760
        %1651 = vmatmul.f32.gmra.mxu0 %v1650
        %v1652 = vpop.f32.mrf.mxu0
        %v1653 = vadd.f32 %v1539, %v1652
        %v1654 = vand.u32 %v1134, 4294901760
        %v1655 = vsub.f32 %v1134, %v1654
        %v1656 = vand.u32 %v1655, 4294901760
        %1657 = vmatmul.f32.gmra.mxu0 %v1656
        %v1658 = vpop.f32.mrf.mxu0
        %v1659 = vadd.f32 %v1544, %v1658
        %v1660 = vand.u32 %v1135, 4294901760
        %v1661 = vsub.f32 %v1135, %v1660
        %v1662 = vand.u32 %v1661, 4294901760
        %1663 = vmatmul.f32.gmra.mxu0 %v1662
        %v1664 = vpop.f32.mrf.mxu0
        %v1665 = vadd.f32 %v1549, %v1664
        %v1666 = vand.u32 %v1136, 4294901760
        %v1667 = vsub.f32 %v1136, %v1666
        %v1668 = vand.u32 %v1667, 4294901760
        %1669 = vmatmul.f32.gmra.mxu0 %v1668
        %v1670 = vpop.f32.mrf.mxu0
        %v1671 = vadd.f32 %v1554, %v1670
        %v1672 = vand.u32 %v1137, 4294901760
        %v1673 = vsub.f32 %v1137, %v1672
        %v1674 = vand.u32 %v1673, 4294901760
        %1675 = vmatmul.f32.gmra.mxu0 %v1674
        %v1676 = vpop.f32.mrf.mxu0
        %v1677 = vadd.f32 %v1559, %v1676
        %v1678 = vand.u32 %v1138, 4294901760
        %v1679 = vsub.f32 %v1138, %v1678
        %v1680 = vand.u32 %v1679, 4294901760
        %1681 = vmatmul.f32.gmra.mxu0 %v1680
        %v1682 = vpop.f32.mrf.mxu0
        %v1683 = vadd.f32 %v1564, %v1682
        %v1684 = vand.u32 %v1139, 4294901760
        %v1685 = vsub.f32 %v1139, %v1684
        %v1686 = vand.u32 %v1685, 4294901760
        %1687 = vmatmul.f32.gmra.mxu0 %v1686
        %v1688 = vpop.f32.mrf.mxu0
        %v1689 = vadd.f32 %v1569, %v1688
        %v1690 = vand.u32 %v1140, 4294901760
        %v1691 = vsub.f32 %v1140, %v1690
        %v1692 = vand.u32 %v1691, 4294901760
        %1693 = vmatmul.f32.gmra.mxu0 %v1692
        %v1694 = vpop.f32.mrf.mxu0
        %v1695 = vadd.f32 %v1574, %v1694
        %v1696 = vand.u32 %v1141, 4294901760
        %v1697 = vsub.f32 %v1141, %v1696
        %v1698 = vand.u32 %v1697, 4294901760
        %1699 = vmatmul.f32.gmra.mxu0 %v1698
        %v1700 = vpop.f32.mrf.mxu0
        %v1701 = vadd.f32 %v1579, %v1700
        %v1702 = vand.u32 %v1142, 4294901760
        %v1703 = vsub.f32 %v1142, %v1702
        %v1704 = vand.u32 %v1703, 4294901760
        %1705 = vmatmul.f32.gmra.mxu0 %v1704
        %v1706 = vpop.f32.mrf.mxu0
        %v1707 = vadd.f32 %v1584, %v1706
        %v1708 = vand.u32 %v1143, 4294901760
        %v1709 = vsub.f32 %v1143, %v1708
        %v1710 = vand.u32 %v1709, 4294901760
        %1711 = vmatmul.f32.gmra.mxu0 %v1710
        %v1712 = vpop.f32.mrf.mxu0
        %v1713 = vadd.f32 %v1589, %v1712
        %v1714 = vand.u32 %v1144, 4294901760
        %v1715 = vsub.f32 %v1144, %v1714
        %v1716 = vand.u32 %v1715, 4294901760
        %1717 = vmatmul.f32.gmra.mxu0 %v1716
        %v1718 = vpop.f32.mrf.mxu0
        %v1719 = vadd.f32 %v1594, %v1718
        %v1720 = vand.u32 %v1145, 4294901760
        %v1721 = vsub.f32 %v1145, %v1720
        %v1722 = vand.u32 %v1721, 4294901760
        %1723 = vmatmul.f32.gmra.mxu0 %v1722
        %v1724 = vpop.f32.mrf.mxu0
        %v1725 = vadd.f32 %v1599, %v1724
        %v1726 = vand.u32 %v1146, 4294901760
        %v1727 = vsub.f32 %v1146, %v1726
        %v1728 = vand.u32 %v1727, 4294901760
        %1729 = vmatmul.f32.gmra.mxu0 %v1728
        %v1730 = vpop.f32.mrf.mxu0
        %v1731 = vadd.f32 %v1604, %v1730
        %v1732 = vand.u32 %v1147, 4294901760
        %v1733 = vsub.f32 %v1147, %v1732
        %v1734 = vand.u32 %v1733, 4294901760
        %1735 = vmatmul.f32.gmra.mxu0 %v1734
        %v1736 = vpop.f32.mrf.mxu0
        %v1737 = vadd.f32 %v1609, %v1736
        %v1738 = vand.u32 %v1148, 4294901760
        %v1739 = vsub.f32 %v1148, %v1738
        %v1740 = vand.u32 %v1739, 4294901760
        %1741 = vmatmul.f32.gmra.mxu0 %v1740
        %v1742 = vpop.f32.mrf.mxu0
        %v1743 = vadd.f32 %v1614, %v1742
        %1744 = vdwg.mxu0
        %v1745 = vand.u32 %v1148, 4294901760
        %v1746 = vsub.f32 %v1148, %v1745
        %v1747 = vand.u32 %v1746, 4294901760
        %1748 = vmatpush.xpose.msra.mxu0 %v1747
        %v1749 = vand.u32 %v1147, 4294901760
        %v1750 = vsub.f32 %v1147, %v1749
        %v1751 = vand.u32 %v1750, 4294901760
        %1752 = vmatpush.xpose.msra.mxu0 %v1751
        %v1753 = vand.u32 %v1146, 4294901760
        %v1754 = vsub.f32 %v1146, %v1753
        %v1755 = vand.u32 %v1754, 4294901760
        %1756 = vmatpush.xpose.msra.mxu0 %v1755
        %v1757 = vand.u32 %v1145, 4294901760
        %v1758 = vsub.f32 %v1145, %v1757
        %v1759 = vand.u32 %v1758, 4294901760
        %1760 = vmatpush.xpose.msra.mxu0 %v1759
        %v1761 = vand.u32 %v1144, 4294901760
        %v1762 = vsub.f32 %v1144, %v1761
        %v1763 = vand.u32 %v1762, 4294901760
        %1764 = vmatpush.xpose.msra.mxu0 %v1763
        %v1765 = vand.u32 %v1143, 4294901760
        %v1766 = vsub.f32 %v1143, %v1765
        %v1767 = vand.u32 %v1766, 4294901760
        %1768 = vmatpush.xpose.msra.mxu0 %v1767
        %v1769 = vand.u32 %v1142, 4294901760
        %v1770 = vsub.f32 %v1142, %v1769
        %v1771 = vand.u32 %v1770, 4294901760
        %1772 = vmatpush.xpose.msra.mxu0 %v1771
        %v1773 = vand.u32 %v1141, 4294901760
        %v1774 = vsub.f32 %v1141, %v1773
        %v1775 = vand.u32 %v1774, 4294901760
        %1776 = vmatpush.xpose.msra.mxu0 %v1775
        %v1777 = vand.u32 %v1140, 4294901760
        %v1778 = vsub.f32 %v1140, %v1777
        %v1779 = vand.u32 %v1778, 4294901760
        %1780 = vmatpush.xpose.msra.mxu0 %v1779
        %v1781 = vand.u32 %v1139, 4294901760
        %v1782 = vsub.f32 %v1139, %v1781
        %v1783 = vand.u32 %v1782, 4294901760
        %1784 = vmatpush.xpose.msra.mxu0 %v1783
        %v1785 = vand.u32 %v1138, 4294901760
        %v1786 = vsub.f32 %v1138, %v1785
        %v1787 = vand.u32 %v1786, 4294901760
        %1788 = vmatpush.xpose.msra.mxu0 %v1787
        %v1789 = vand.u32 %v1137, 4294901760
        %v1790 = vsub.f32 %v1137, %v1789
        %v1791 = vand.u32 %v1790, 4294901760
        %1792 = vmatpush.xpose.msra.mxu0 %v1791
        %v1793 = vand.u32 %v1136, 4294901760
        %v1794 = vsub.f32 %v1136, %v1793
        %v1795 = vand.u32 %v1794, 4294901760
        %1796 = vmatpush.xpose.msra.mxu0 %v1795
        %v1797 = vand.u32 %v1135, 4294901760
        %v1798 = vsub.f32 %v1135, %v1797
        %v1799 = vand.u32 %v1798, 4294901760
        %1800 = vmatpush.xpose.msra.mxu0 %v1799
        %v1801 = vand.u32 %v1134, 4294901760
        %v1802 = vsub.f32 %v1134, %v1801
        %v1803 = vand.u32 %v1802, 4294901760
        %1804 = vmatpush.xpose.msra.mxu0 %v1803
        %v1805 = vand.u32 %v1133, 4294901760
        %v1806 = vsub.f32 %v1133, %v1805
        %v1807 = vand.u32 %v1806, 4294901760
        %1808 = vmatpush.xpose.msra.mxu0 %v1807
        %v1809 = vand.u32 %v1133, 4294901760
        %1810 = vmatmul.f32.gmra.mxu0 %v1809
        %v1811 = vpop.f32.mrf.mxu0
        %v1812 = vadd.f32 %v1653, %v1811
        %v1813 = vand.u32 %v1134, 4294901760
        %1814 = vmatmul.f32.gmra.mxu0 %v1813
        %v1815 = vpop.f32.mrf.mxu0
        %v1816 = vadd.f32 %v1659, %v1815
        %v1817 = vand.u32 %v1135, 4294901760
        %1818 = vmatmul.f32.gmra.mxu0 %v1817
        %v1819 = vpop.f32.mrf.mxu0
        %v1820 = vadd.f32 %v1665, %v1819
        %v1821 = vand.u32 %v1136, 4294901760
        %1822 = vmatmul.f32.gmra.mxu0 %v1821
        %v1823 = vpop.f32.mrf.mxu0
        %v1824 = vadd.f32 %v1671, %v1823
        %v1825 = vand.u32 %v1137, 4294901760
        %1826 = vmatmul.f32.gmra.mxu0 %v1825
        %v1827 = vpop.f32.mrf.mxu0
        %v1828 = vadd.f32 %v1677, %v1827
        %v1829 = vand.u32 %v1138, 4294901760
        %1830 = vmatmul.f32.gmra.mxu0 %v1829
        %v1831 = vpop.f32.mrf.mxu0
        %v1832 = vadd.f32 %v1683, %v1831
        %v1833 = vand.u32 %v1139, 4294901760
        %1834 = vmatmul.f32.gmra.mxu0 %v1833
        %v1835 = vpop.f32.mrf.mxu0
        %v1836 = vadd.f32 %v1689, %v1835
        %v1837 = vand.u32 %v1140, 4294901760
        %1838 = vmatmul.f32.gmra.mxu0 %v1837
        %v1839 = vpop.f32.mrf.mxu0
        %v1840 = vadd.f32 %v1695, %v1839
        %v1841 = vand.u32 %v1141, 4294901760
        %1842 = vmatmul.f32.gmra.mxu0 %v1841
        %v1843 = vpop.f32.mrf.mxu0
        %v1844 = vadd.f32 %v1701, %v1843
        %v1845 = vand.u32 %v1142, 4294901760
        %1846 = vmatmul.f32.gmra.mxu0 %v1845
        %v1847 = vpop.f32.mrf.mxu0
        %v1848 = vadd.f32 %v1707, %v1847
        %v1849 = vand.u32 %v1143, 4294901760
        %1850 = vmatmul.f32.gmra.mxu0 %v1849
        %v1851 = vpop.f32.mrf.mxu0
        %v1852 = vadd.f32 %v1713, %v1851
        %v1853 = vand.u32 %v1144, 4294901760
        %1854 = vmatmul.f32.gmra.mxu0 %v1853
        %v1855 = vpop.f32.mrf.mxu0
        %v1856 = vadd.f32 %v1719, %v1855
        %v1857 = vand.u32 %v1145, 4294901760
        %1858 = vmatmul.f32.gmra.mxu0 %v1857
        %v1859 = vpop.f32.mrf.mxu0
        %v1860 = vadd.f32 %v1725, %v1859
        %v1861 = vand.u32 %v1146, 4294901760
        %1862 = vmatmul.f32.gmra.mxu0 %v1861
        %v1863 = vpop.f32.mrf.mxu0
        %v1864 = vadd.f32 %v1731, %v1863
        %v1865 = vand.u32 %v1147, 4294901760
        %1866 = vmatmul.f32.gmra.mxu0 %v1865
        %v1867 = vpop.f32.mrf.mxu0
        %v1868 = vadd.f32 %v1737, %v1867
        %v1869 = vand.u32 %v1148, 4294901760
        %1870 = vmatmul.f32.gmra.mxu0 %v1869
        %v1871 = vpop.f32.mrf.mxu0
        %v1872 = vadd.f32 %v1743, %v1871
        %1873 = vdwg.mxu0
        %v1874 = vand.u32 %v1148, 4294901760
        %1875 = vmatpush.xpose.msra.mxu0 %v1874
        %v1876 = vand.u32 %v1147, 4294901760
        %1877 = vmatpush.xpose.msra.mxu0 %v1876
        %v1878 = vand.u32 %v1146, 4294901760
        %1879 = vmatpush.xpose.msra.mxu0 %v1878
        %v1880 = vand.u32 %v1145, 4294901760
        %1881 = vmatpush.xpose.msra.mxu0 %v1880
        %v1882 = vand.u32 %v1144, 4294901760
        %1883 = vmatpush.xpose.msra.mxu0 %v1882
        %v1884 = vand.u32 %v1143, 4294901760
        %1885 = vmatpush.xpose.msra.mxu0 %v1884
        %v1886 = vand.u32 %v1142, 4294901760
        %1887 = vmatpush.xpose.msra.mxu0 %v1886
        %v1888 = vand.u32 %v1141, 4294901760
        %1889 = vmatpush.xpose.msra.mxu0 %v1888
        %v1890 = vand.u32 %v1140, 4294901760
        %1891 = vmatpush.xpose.msra.mxu0 %v1890
        %v1892 = vand.u32 %v1139, 4294901760
        %1893 = vmatpush.xpose.msra.mxu0 %v1892
        %v1894 = vand.u32 %v1138, 4294901760
        %1895 = vmatpush.xpose.msra.mxu0 %v1894
        %v1896 = vand.u32 %v1137, 4294901760
        %1897 = vmatpush.xpose.msra.mxu0 %v1896
        %v1898 = vand.u32 %v1136, 4294901760
        %1899 = vmatpush.xpose.msra.mxu0 %v1898
        %v1900 = vand.u32 %v1135, 4294901760
        %1901 = vmatpush.xpose.msra.mxu0 %v1900
        %v1902 = vand.u32 %v1134, 4294901760
        %1903 = vmatpush.xpose.msra.mxu0 %v1902
        %v1904 = vand.u32 %v1133, 4294901760
        %1905 = vmatpush.xpose.msra.mxu0 %v1904
        %v1906 = vand.u32 %v1133, 4294901760
        %1907 = vmatmul.f32.gmra.mxu0 %v1906
        %v1908 = vpop.f32.mrf.mxu0
        %v1909 = vadd.f32 %v1812, %v1908
        %v1910 = vand.u32 %v1134, 4294901760
        %1911 = vmatmul.f32.gmra.mxu0 %v1910
        %v1912 = vpop.f32.mrf.mxu0
        %v1913 = vadd.f32 %v1816, %v1912
        %v1914 = vand.u32 %v1135, 4294901760
        %1915 = vmatmul.f32.gmra.mxu0 %v1914
        %v1916 = vpop.f32.mrf.mxu0
        %v1917 = vadd.f32 %v1820, %v1916
        %v1918 = vand.u32 %v1136, 4294901760
        %1919 = vmatmul.f32.gmra.mxu0 %v1918
        %v1920 = vpop.f32.mrf.mxu0
        %v1921 = vadd.f32 %v1824, %v1920
        %v1922 = vand.u32 %v1137, 4294901760
        %1923 = vmatmul.f32.gmra.mxu0 %v1922
        %v1924 = vpop.f32.mrf.mxu0
        %v1925 = vadd.f32 %v1828, %v1924
        %v1926 = vand.u32 %v1138, 4294901760
        %1927 = vmatmul.f32.gmra.mxu0 %v1926
        %v1928 = vpop.f32.mrf.mxu0
        %v1929 = vadd.f32 %v1832, %v1928
        %v1930 = vand.u32 %v1139, 4294901760
        %1931 = vmatmul.f32.gmra.mxu0 %v1930
        %v1932 = vpop.f32.mrf.mxu0
        %v1933 = vadd.f32 %v1836, %v1932
        %v1934 = vand.u32 %v1140, 4294901760
        %1935 = vmatmul.f32.gmra.mxu0 %v1934
        %v1936 = vpop.f32.mrf.mxu0
        %v1937 = vadd.f32 %v1840, %v1936
        %v1938 = vand.u32 %v1141, 4294901760
        %1939 = vmatmul.f32.gmra.mxu0 %v1938
        %v1940 = vpop.f32.mrf.mxu0
        %v1941 = vadd.f32 %v1844, %v1940
        %v1942 = vand.u32 %v1142, 4294901760
        %1943 = vmatmul.f32.gmra.mxu0 %v1942
        %v1944 = vpop.f32.mrf.mxu0
        %v1945 = vadd.f32 %v1848, %v1944
        %v1946 = vand.u32 %v1143, 4294901760
        %1947 = vmatmul.f32.gmra.mxu0 %v1946
        %v1948 = vpop.f32.mrf.mxu0
        %v1949 = vadd.f32 %v1852, %v1948
        %v1950 = vand.u32 %v1144, 4294901760
        %1951 = vmatmul.f32.gmra.mxu0 %v1950
        %v1952 = vpop.f32.mrf.mxu0
        %v1953 = vadd.f32 %v1856, %v1952
        %v1954 = vand.u32 %v1145, 4294901760
        %1955 = vmatmul.f32.gmra.mxu0 %v1954
        %v1956 = vpop.f32.mrf.mxu0
        %v1957 = vadd.f32 %v1860, %v1956
        %v1958 = vand.u32 %v1146, 4294901760
        %1959 = vmatmul.f32.gmra.mxu0 %v1958
        %v1960 = vpop.f32.mrf.mxu0
        %v1961 = vadd.f32 %v1864, %v1960
        %v1962 = vand.u32 %v1147, 4294901760
        %1963 = vmatmul.f32.gmra.mxu0 %v1962
        %v1964 = vpop.f32.mrf.mxu0
        %v1965 = vadd.f32 %v1868, %v1964
        %v1966 = vand.u32 %v1148, 4294901760
        %1967 = vmatmul.f32.gmra.mxu0 %v1966
        %v1968 = vpop.f32.mrf.mxu0
        %v1969 = vadd.f32 %v1872, %v1968
        %1970 = vdwg.mxu0
        %v1971 = vmul.f32 %v1133, %v1133
        %v1972 = vmul.f32 %v1134, %v1134
        %v1973 = vmul.f32 %v1135, %v1135
        %v1974 = vmul.f32 %v1136, %v1136
        %v1975 = vmul.f32 %v1137, %v1137
        %v1976 = vmul.f32 %v1138, %v1138
        %v1977 = vmul.f32 %v1139, %v1139
        %v1978 = vmul.f32 %v1140, %v1140
        %v1979 = vmul.f32 %v1141, %v1141
        %v1980 = vmul.f32 %v1142, %v1142
        %v1981 = vmul.f32 %v1143, %v1143
        %v1982 = vmul.f32 %v1144, %v1144
        %v1983 = vmul.f32 %v1145, %v1145
        %v1984 = vmul.f32 %v1146, %v1146
        %v1985 = vmul.f32 %v1147, %v1147
        %v1986 = vmul.f32 %v1148, %v1148
        %v1987 = vadd.f32 %v1971, %v1972
        %v1988 = vadd.f32 %v1987, %v1973
        %v1989 = vadd.f32 %v1988, %v1974
        %v1990 = vadd.f32 %v1989, %v1975
        %v1991 = vadd.f32 %v1990, %v1976
        %v1992 = vadd.f32 %v1991, %v1977
        %v1993 = vadd.f32 %v1992, %v1978
        %v1994 = vadd.f32 %v1993, %v1979
        %v1995 = vadd.f32 %v1994, %v1980
        %v1996 = vadd.f32 %v1995, %v1981
        %v1997 = vadd.f32 %v1996, %v1982
        %v1998 = vadd.f32 %v1997, %v1983
        %v1999 = vadd.f32 %v1998, %v1984
        %v2000 = vadd.f32 %v1999, %v1985
        %v2001 = vadd.f32 %v2000, %v1986
        %2002 = vadd.xlane.f32.xlu0 %v2001
        %v2003 = vpop.xlane.xlu0 %2002
        %v2004 = vrot.slane %v2003, 4
        %v2005 = vadd.f32 %v2003, %v2004
        %v2006 = vrot.slane %v2005, 2
        %v2007 = vadd.f32 %v2005, %v2006
        %v2008 = vrot.slane %v2007, 1
        %v2009 = vadd.f32 %v2007, %v2008
        %s2010 = vtos %v2009
        %v2011 = vmul.f32 %v171, %v171
        %v2012 = vmul.f32 %v172, %v172
        %v2013 = vmul.f32 %v173, %v173
        %v2014 = vmul.f32 %v174, %v174
        %v2015 = vmul.f32 %v175, %v175
        %v2016 = vmul.f32 %v176, %v176
        %v2017 = vmul.f32 %v177, %v177
        %v2018 = vmul.f32 %v178, %v178
        %v2019 = vmul.f32 %v179, %v179
        %v2020 = vmul.f32 %v180, %v180
        %v2021 = vmul.f32 %v181, %v181
        %v2022 = vmul.f32 %v182, %v182
        %v2023 = vmul.f32 %v183, %v183
        %v2024 = vmul.f32 %v184, %v184
        %v2025 = vmul.f32 %v185, %v185
        %v2026 = vmul.f32 %v186, %v186
        %v2027 = vadd.f32 %v2011, %v2012
        %v2028 = vadd.f32 %v2027, %v2013
        %v2029 = vadd.f32 %v2028, %v2014
        %v2030 = vadd.f32 %v2029, %v2015
        %v2031 = vadd.f32 %v2030, %v2016
        %v2032 = vadd.f32 %v2031, %v2017
        %v2033 = vadd.f32 %v2032, %v2018
        %v2034 = vadd.f32 %v2033, %v2019
        %v2035 = vadd.f32 %v2034, %v2020
        %v2036 = vadd.f32 %v2035, %v2021
        %v2037 = vadd.f32 %v2036, %v2022
        %v2038 = vadd.f32 %v2037, %v2023
        %v2039 = vadd.f32 %v2038, %v2024
        %v2040 = vadd.f32 %v2039, %v2025
        %v2041 = vadd.f32 %v2040, %v2026
        %2042 = vadd.xlane.f32.xlu0 %v2041
        %v2043 = vpop.xlane.xlu0 %2042
        %v2044 = vrot.slane %v2043, 4
        %v2045 = vadd.f32 %v2043, %v2044
        %v2046 = vrot.slane %v2045, 2
        %v2047 = vadd.f32 %v2045, %v2046
        %v2048 = vrot.slane %v2047, 1
        %v2049 = vadd.f32 %v2047, %v2048
        %s2050 = vtos %v2049
        %v2051 = vld [vmem:[#allocation3] sm:$0xff]
        %v2052 = vld [vmem:[#allocation3 + $0x8] sm:$0xff]
        %v2053 = vld [vmem:[#allocation3 + $0x10] sm:$0xff]
        %v2054 = vld [vmem:[#allocation3 + $0x18] sm:$0xff]
        %v2055 = vld [vmem:[#allocation3 + $0x20] sm:$0xff]
        %v2056 = vld [vmem:[#allocation3 + $0x28] sm:$0xff]
        %v2057 = vld [vmem:[#allocation3 + $0x30] sm:$0xff]
        %v2058 = vld [vmem:[#allocation3 + $0x38] sm:$0xff]
        %v2059 = vld [vmem:[#allocation3 + $0x40] sm:$0xff]
        %v2060 = vld [vmem:[#allocation3 + $0x48] sm:$0xff]
        %v2061 = vld [vmem:[#allocation3 + $0x50] sm:$0xff]
        %v2062 = vld [vmem:[#allocation3 + $0x58] sm:$0xff]
        %v2063 = vld [vmem:[#allocation3 + $0x60] sm:$0xff]
        %v2064 = vld [vmem:[#allocation3 + $0x68] sm:$0xff]
        %v2065 = vld [vmem:[#allocation3 + $0x70] sm:$0xff]
        %v2066 = vld [vmem:[#allocation3 + $0x78] sm:$0xff]
        %v2067 = vmul.f32 %v2051, %v1909
        %v2068 = vmul.f32 %v2052, %v1913
        %v2069 = vmul.f32 %v2053, %v1917
        %v2070 = vmul.f32 %v2054, %v1921
        %v2071 = vmul.f32 %v2055, %v1925
        %v2072 = vmul.f32 %v2056, %v1929
        %v2073 = vmul.f32 %v2057, %v1933
        %v2074 = vmul.f32 %v2058, %v1937
        %v2075 = vmul.f32 %v2059, %v1941
        %v2076 = vmul.f32 %v2060, %v1945
        %v2077 = vmul.f32 %v2061, %v1949
        %v2078 = vmul.f32 %v2062, %v1953
        %v2079 = vmul.f32 %v2063, %v1957
        %v2080 = vmul.f32 %v2064, %v1961
        %v2081 = vmul.f32 %v2065, %v1965
        %v2082 = vmul.f32 %v2066, %v1969
        %v2083 = vadd.f32 %v2067, %v2068
        %v2084 = vadd.f32 %v2083, %v2069
        %v2085 = vadd.f32 %v2084, %v2070
        %v2086 = vadd.f32 %v2085, %v2071
        %v2087 = vadd.f32 %v2086, %v2072
        %v2088 = vadd.f32 %v2087, %v2073
        %v2089 = vadd.f32 %v2088, %v2074
        %v2090 = vadd.f32 %v2089, %v2075
        %v2091 = vadd.f32 %v2090, %v2076
        %v2092 = vadd.f32 %v2091, %v2077
        %v2093 = vadd.f32 %v2092, %v2078
        %v2094 = vadd.f32 %v2093, %v2079
        %v2095 = vadd.f32 %v2094, %v2080
        %v2096 = vadd.f32 %v2095, %v2081
        %v2097 = vadd.f32 %v2096, %v2082
        %2098 = vadd.xlane.f32.xlu0 %v2097
        %v2099 = vpop.xlane.xlu0 %2098
        %v2100 = vrot.slane %v2099, 4
        %v2101 = vadd.f32 %v2099, %v2100
        %v2102 = vrot.slane %v2101, 2
        %v2103 = vadd.f32 %v2101, %v2102
        %v2104 = vrot.slane %v2103, 1
        %v2105 = vadd.f32 %v2103, %v2104
        %s2106 = vtos %v2105
        %s2107 = smul.f32 %s2050, %s2106
        %v2108 = vstv %s2107
        %v2109 = vrsqrt.pop %v2108
        %v2110 = vmul.f32 %v2109, %v2108
        %v2111 = vmul.f32 %v2110, %v2109
        %v2112 = vmul.f32 0.5, %v2111
        %v2113 = vsub.f32 1.5, %v2112
        %v2114 = vmul.f32 %v2109, %v2113
        %vm2115 = vweird.f32 %v2108
        %vm2116 = vweird.f32 %v2109
        %vm2117 = vmor %vm2115, %vm2116
        %v2118 = vsel %vm2117, %v2109, %v2114
        %s2119 = vtos %v2118
        %s2120 = smul.f32 %s2010, %s2119
        %s2121 = smax.f32 %s2120, -1.0
        %s2122 = smin.f32 %s2121, 1.0
        %s2123 = scalar_lea.smem [#allocation9], %s170
        %2124 = sst [smem:[%s2123]] %s2122
        %2125 = vst [vmem:[#allocation3] sm:$0xff] %v1909
        %2126 = vst [vmem:[#allocation3 + $0x8] sm:$0xff] %v1913
        %2127 = vst [vmem:[#allocation3 + $0x10] sm:$0xff] %v1917
        %2128 = vst [vmem:[#allocation3 + $0x18] sm:$0xff] %v1921
        %2129 = vst [vmem:[#allocation3 + $0x20] sm:$0xff] %v1925
        %2130 = vst [vmem:[#allocation3 + $0x28] sm:$0xff] %v1929
        %2131 = vst [vmem:[#allocation3 + $0x30] sm:$0xff] %v1933
        %2132 = vst [vmem:[#allocation3 + $0x38] sm:$0xff] %v1937
        %2133 = vst [vmem:[#allocation3 + $0x40] sm:$0xff] %v1941
        %2134 = vst [vmem:[#allocation3 + $0x48] sm:$0xff] %v1945
        %2135 = vst [vmem:[#allocation3 + $0x50] sm:$0xff] %v1949
        %2136 = vst [vmem:[#allocation3 + $0x58] sm:$0xff] %v1953
        %2137 = vst [vmem:[#allocation3 + $0x60] sm:$0xff] %v1957
        %2138 = vst [vmem:[#allocation3 + $0x68] sm:$0xff] %v1961
        %2139 = vst [vmem:[#allocation3 + $0x70] sm:$0xff] %v1965
        %2140 = vst [vmem:[#allocation3 + $0x78] sm:$0xff] %v1969
        %s2141 = sand.u32 %s59, 1
        %s2142 = scalar_lea.sflag [#allocation6], %s2141
        %s2143 = sand.u32 %s59, 1
        %s2144 = smul.addr %s2143, 128
        %s2145 = scalar_lea.vmem [#allocation8], %s2144
        // Predicated region
        $region37: #{tpu_custom_call.1} parent=23 // pred_check
          %p2146 = pneg %p69
        $region38: #{tpu_custom_call.1} parent=23 // pred_check_branch
          %2148 = sbr.rel (%p2146) target = $region40
        $region39: #{tpu_custom_call.1} parent=23 // pred_region
          %s2149 = ssub.s32 2, %s21
          %2151 = vsyncadd %s2142, 0
          %s2152 = smul.addr %s2149, 16
          %s2153 = smul.addr %s2152, 8
          %s2154 = scalar_lea.hbm %s1, %s2153
          %s2155 = sshll.u32 %s2145, 4
          %s2156 = int_to_ptr.vmem [resolvable:$true] %s2155
          %s2157 = sshll.u32 %s2154, 4
          %s2158 = int_to_ptr.hbm [resolvable:$true] %s2157
          %2163 = dma.vmem_to_hbm [thread:$0]  %s2156, 2048, %s2158, %s2142, 128, 128, 8
        $region40: #{tpu_custom_call.1} parent=23 // pred_fallthru
          _
        // Predicated region
        $region41: #{tpu_custom_call.1} parent=23 // pred_check
          %p2164 = pneg %p90
        $region42: #{tpu_custom_call.1} parent=23 // pred_check_branch
          %2166 = sbr.rel (%p2164) target = $region44
        $region43: #{tpu_custom_call.1} parent=23 // pred_region
          %2168 = vsyncadd [#allocation7], 0
          %s2170 = sshll.u32 %s2, 4
          %s2171 = int_to_ptr.hbm [resolvable:$true] %s2170
          %2173 = dma.smem_to_hbm [#allocation9], 16, %s2171, [#allocation7]
        $region44: #{tpu_custom_call.1} parent=23 // pred_fallthru
          _
        // Predicated region
        $region45: #{tpu_custom_call.1} parent=23 // pred_check
          %p2174 = pneg %p90
        $region46: #{tpu_custom_call.1} parent=23 // pred_check_branch
          %2176 = sbr.rel (%p2174) target = $region48
        $region47: #{tpu_custom_call.1} parent=23 // pred_region
          %2178 = dma.done [#allocation7], 16
        $region48: #{tpu_custom_call.1} parent=23 // pred_fallthru
          _
        %2179 = sfence
      $region24: #{tpu_custom_call.1} parent=5 // pred_fallthru
        _
      %p2180 = scmp.le.s32.totalorder 2, %s16
      // Predicated region
      $region49: #{tpu_custom_call.1} parent=5 // pred_check
        %p2181 = pneg %p2180
      $region50: #{tpu_custom_call.1} parent=5 // pred_check_branch
        %2183 = sbr.rel (%p2181) target = $region52
      $region51: #{tpu_custom_call.1} parent=5 // pred_region
        %s2184 = ssub.s32 %s16, 2
        // Predicated region
        $region53: #{tpu_custom_call.1} parent=51 // pred_check
          %p2185 = pneg %p75
        $region54: #{tpu_custom_call.1} parent=51 // pred_check_branch
          %2187 = sbr.rel (%p2185) target = $region56
        $region55: #{tpu_custom_call.1} parent=51 // pred_region
          %s2188 = sand.u32 %s60, 1
          %s2189 = scalar_lea.sflag [#allocation6], %s2188
          %s2190 = sand.u32 %s60, 1
          %s2191 = smul.addr %s2190, 128
          %s2192 = scalar_lea.vmem [#allocation8], %s2191
          %2194 = dma.done %s2189, 2048
        $region56: #{tpu_custom_call.1} parent=51 // pred_fallthru
          _
      $region52: #{tpu_custom_call.1} parent=5 // pred_fallthru
        _
    $region6: #{tpu_custom_call.1} parent=1 // loop_footer
      %s20 = sadd.s32 1, %s16
    $region7: #{tpu_custom_call.1} parent=1 // loop_footer_branch
      %15 = sbr.rel target = $region3
    $region8: #{tpu_custom_call.1} parent=1 // loop_exit
      _
    %2195 = vsyncpa [#allocation5], 1
    %s2196 = scalar_lea.sflag [#allocation5], 1
    %2197 = vsyncpa %s2196, 1
    %2198 = vsyncpa [#allocation6], 1
    %s2199 = scalar_lea.sflag [#allocation6], 1
    %2200 = vsyncpa %s2199, 1
    %2201 = vsyncpa [#allocation7], 1
    %s2202 = scalar_lea.sflag [#allocation7], 1
    %2203 = vsyncpa %s2202, 1

</llo_original>
